<compile_context>
chip_gen: v7x
topology: tpu7x:2x2x1
jax: 0.10.0
libtpu: 0.0.40
codegen_flags: <defaults>
</compile_context>

<pallas_src>
import functools
import math

import jax
import jax.numpy as jnp
from jax.experimental import pallas as pl
from jax.experimental.pallas import tpu as pltpu


def _pick_heads_per_block(num_heads, head_dim):
    """Smallest head-group size whose lane width (heads*head_dim) is a multiple of 128.

    Falls back to a single group spanning the full hidden dim when no such group
    exists (e.g. tiny demo shapes), which is always a legal full-extent block.
    """
    for hpb in range(1, num_heads + 1):
        if num_heads % hpb == 0 and (hpb * head_dim) % 128 == 0:
            return hpb
    return num_heads


def bert_self_attention_kernel(x_ref, mask_ref, wq_ref, bq_ref, wk_ref, bk_ref,
                               wv_ref, bv_ref, o_ref, *, heads_per_block,
                               head_dim, scale, approx_recip):
    # x_ref:    (1, S, H)   activation slab; resident across the head-group grid axis
    # mask_ref: (1, 1, S)   additive key mask (f32, zeros if no mask)
    # w*_ref:   (GW, H)     row-slice of the torch [out, in] weight for this head group
    # b*_ref:   (1, GW)     bias slice
    # o_ref:    (1, S, GW)  context output slab for this head group
    x = x_ref[0]                                    # (S, H), caller-chosen dtype
    cdims = (((1,), (1,)), ((), ()))                # contract x's H with w's "in" dim

    def proj(w_ref, b_ref, post_scale=None):
        y = jax.lax.dot_general(x, w_ref[...], cdims,
                                preferred_element_type=jnp.float32)
        y = y + b_ref[...].astype(jnp.float32)      # (S, GW) f32
        if post_scale is not None:
            y = y * post_scale                      # fold 1/sqrt(d) into q once
        return y.astype(x.dtype)                    # bf16 inputs for the MXU when caller uses bf16

    q = proj(wq_ref, bq_ref, post_scale=scale)
    k = proj(wk_ref, bk_ref)
    v = proj(wv_ref, bv_ref)

    mask = mask_ref[0].astype(jnp.float32)          # (1, S): broadcasts over query rows

    ctx_heads = []
    for h in range(heads_per_block):                # small static unroll (<= group size)
        sl = slice(h * head_dim, (h + 1) * head_dim)
        qh, kh, vh = q[:, sl], k[:, sl], v[:, sl]   # (S, d)
        # scores = (q/sqrt(d)) @ k^T + mask   (f32 on the MXU; scale already folded)
        scores = jax.lax.dot_general(qh, kh, cdims,
                                     preferred_element_type=jnp.float32)
        scores = scores + mask                      # (S, S)
        # numerically-stable softmax with deferred normalization
        m = jnp.max(scores, axis=-1, keepdims=True)
        e = jnp.exp(scores - m)                     # unnormalized probs
        denom = jnp.sum(e, axis=-1, keepdims=True)  # (S, 1)
        # TODO(synk): attention_probs dropout (training mode) not applied here.
        ctx = jnp.dot(e.astype(vh.dtype), vh,
                      preferred_element_type=jnp.float32)       # (S, d) f32
        ctx = ctx * pl.reciprocal(denom, approx=approx_recip)   # normalize (S,d), not (S,S)
        ctx_heads.append(ctx)

    o_tile = ctx_heads[0] if len(ctx_heads) == 1 else jnp.concatenate(ctx_heads, -1)
    o_ref[0] = o_tile.astype(o_ref.dtype)           # single lane-dense (S, GW) store


def bert_self_attention(hidden_states, wq, bq, wk, bk, wv, bv, *,
                        num_attention_heads, attention_mask=None,
                        approx_recip=False):
    """hidden_states: [B, S, H]; w*: [H, H] torch Linear weights (y = x @ w.T + b);
    b*: [H]; attention_mask: None, [B, S], [B, 1, S] or HF-style additive [B, 1, 1, S]."""
    B, S, H = hidden_states.shape
    assert H % num_attention_heads == 0
    head_dim = H // num_attention_heads
    scale = 1.0 / math.sqrt(head_dim)

    heads_per_block = _pick_heads_per_block(num_attention_heads, head_dim)
    gw = heads_per_block * head_dim                 # group width (lanes per output block)
    num_groups = num_attention_heads // heads_per_block

    if attention_mask is None:
        mask = jnp.zeros((B, 1, S), jnp.float32)
    else:
        if attention_mask.shape not in ((B, S), (B, 1, S), (B, 1, 1, S)):
            raise ValueError(
                f"Only key-broadcast additive masks are supported; got shape "
                f"{attention_mask.shape}, expected {(B, S)}, {(B, 1, S)} or {(B, 1, 1, S)}.")
        mask = attention_mask.reshape(B, 1, S).astype(jnp.float32)

    b2 = lambda b: b.reshape(1, H)
    kernel = functools.partial(bert_self_attention_kernel,
                               heads_per_block=heads_per_block,
                               head_dim=head_dim, scale=scale,
                               approx_recip=approx_recip)

    out = pl.pallas_call(
        kernel,
        out_shape=jax.ShapeDtypeStruct((B, S, H), hidden_states.dtype),
        grid_spec=pltpu.PrefetchScalarGridSpec(
            num_scalar_prefetch=0,
            grid=(B, num_groups),
            in_specs=[
                pl.BlockSpec((1, S, H), lambda b, g: (b, 0, 0)),   # x: resident over g
                pl.BlockSpec((1, 1, S), lambda b, g: (b, 0, 0)),   # additive key mask
                pl.BlockSpec((gw, H), lambda b, g: (g, 0)),        # Wq row-slice for group g
                pl.BlockSpec((1, gw), lambda b, g: (0, g)),        # bq slice
                pl.BlockSpec((gw, H), lambda b, g: (g, 0)),        # Wk row-slice
                pl.BlockSpec((1, gw), lambda b, g: (0, g)),        # bk slice
                pl.BlockSpec((gw, H), lambda b, g: (g, 0)),        # Wv row-slice
                pl.BlockSpec((1, gw), lambda b, g: (0, g)),        # bv slice
            ],
            out_specs=pl.BlockSpec((1, S, gw), lambda b, g: (b, 0, g)),
        ),
        compiler_params=pltpu.CompilerParams(
            dimension_semantics=("parallel", "parallel"),   # B x head-groups -> megacore work
            vmem_limit_bytes=48 * 1024 * 1024),              # above v5e 16 MiB default, below v7x 64 MiB physical
    )(hidden_states, mask, wq, b2(bq), wk, b2(bk), wv, b2(bv))
    return out


def reference(x, wq, bq, wk, bk, wv, bv, num_heads, attention_mask=None):
    B, S, H = x.shape
    d = H // num_heads
    hp = jax.lax.Precision.HIGHEST

    def proj(w, b):
        y = jnp.einsum("bsh,oh->bso", x, w, precision=hp) + b
        return y.reshape(B, S, num_heads, d).transpose(0, 2, 1, 3)

    q, k, v = proj(wq, bq), proj(wk, bk), proj(wv, bv)
    scores = jnp.einsum("bhqd,bhkd->bhqk", q, k, precision=hp) * (1.0 / math.sqrt(d))
    if attention_mask is not None:
        scores = scores + attention_mask            # [B,1,1,S] broadcast
    probs = jax.nn.softmax(scores, axis=-1)
    ctx = jnp.einsum("bhqk,bhkd->bhqd", probs, v, precision=hp)
    return ctx.transpose(0, 2, 1, 3).reshape(B, S, H)


if __name__ == "__main__":
    key = jax.random.PRNGKey(0)
    ks = jax.random.split(key, 14)

    # ------------------------------------------------------------------ small demo
    B, S, H, NH = 2, 8, 32, 4
    x = jax.random.normal(ks[0], (B, S, H), dtype=jnp.float32)
    bound = 1.0 / math.sqrt(H)
    init_w = lambda k: jax.random.uniform(k, (H, H), jnp.float32, -bound, bound)
    init_b = lambda k: jax.random.uniform(k, (H,), jnp.float32, -bound, bound)
    wq, wk, wv = init_w(ks[1]), init_w(ks[2]), init_w(ks[3])
    bq, bk, bv = init_b(ks[4]), init_b(ks[5]), init_b(ks[6])

    # HF-style additive key mask: mask out the last 2 key positions of batch element 1.
    mask = jnp.zeros((B, 1, 1, S), jnp.float32)
    mask = mask.at[1, :, :, -2:].set(-10000.0)

    # --- f32 run (with mask): tight correctness check ---------------------------------
    out = bert_self_attention(x, wq, bq, wk, bk, wv, bv,
                              num_attention_heads=NH, attention_mask=mask)
    out = jax.block_until_ready(out)
    ref = reference(x, wq, bq, wk, bk, wv, bv, NH, mask)
    err_f32 = float(jnp.max(jnp.abs(out - ref)))
    assert jnp.allclose(out, ref, atol=1e-4, rtol=1e-4), err_f32

    # --- bf16 run (no mask): bf16 MXU inputs + f32 accumulation + approx reciprocal ---
    bf = jnp.bfloat16
    out_bf16 = bert_self_attention(
        x.astype(bf), wq.astype(bf), bq.astype(bf), wk.astype(bf), bk.astype(bf),
        wv.astype(bf), bv.astype(bf), num_attention_heads=NH, approx_recip=True)
    out_bf16 = jax.block_until_ready(out_bf16)
    ref2 = reference(x, wq, bq, wk, bk, wv, bv, NH, None)
    err_bf16 = float(jnp.max(jnp.abs(out_bf16.astype(jnp.float32) - ref2)))
    assert err_bf16 < 7.5e-2, err_bf16

    # --- grouped-heads path: H=256, NH=2 -> two 128-lane head groups (grid=(B, 2)) ----
    B2, S2, H2, NH2 = 1, 16, 256, 2
    x2 = jax.random.normal(ks[7], (B2, S2, H2), dtype=jnp.float32)
    bound2 = 1.0 / math.sqrt(H2)
    init_w2 = lambda k: jax.random.uniform(k, (H2, H2), jnp.float32, -bound2, bound2)
    init_b2 = lambda k: jax.random.uniform(k, (H2,), jnp.float32, -bound2, bound2)
    wq2, wk2, wv2 = init_w2(ks[8]), init_w2(ks[9]), init_w2(ks[10])
    bq2, bk2, bv2 = init_b2(ks[11]), init_b2(ks[12]), init_b2(ks[13])
    mask2 = jnp.zeros((B2, S2), jnp.float32).at[0, -3:].set(-10000.0)   # [B, S] form

    out2 = bert_self_attention(x2, wq2, bq2, wk2, bk2, wv2, bv2,
                               num_attention_heads=NH2, attention_mask=mask2)
    out2 = jax.block_until_ready(out2)
    ref3 = reference(x2, wq2, bq2, wk2, bk2, wv2, bv2, NH2,
                     mask2.reshape(B2, 1, 1, S2))
    err_grp = float(jnp.max(jnp.abs(out2 - ref3)))
    assert jnp.allclose(out2, ref3, atol=1e-4, rtol=1e-4), err_grp

    print("KERNEL_OK")
</pallas_src>

<mosaic_0001>
module attributes {stable_mosaic.version = 11 : i64} {
  func.func @bert_self_attention_kernel(%arg0: i32, %arg1: i32, %arg2: memref<1x8x32xf32, #tpu.memory_space<vmem>>, %arg3: memref<1x1x8xf32, #tpu.memory_space<vmem>>, %arg4: memref<32x32xf32, #tpu.memory_space<vmem>>, %arg5: memref<1x32xf32, #tpu.memory_space<vmem>>, %arg6: memref<32x32xf32, #tpu.memory_space<vmem>>, %arg7: memref<1x32xf32, #tpu.memory_space<vmem>>, %arg8: memref<32x32xf32, #tpu.memory_space<vmem>>, %arg9: memref<1x32xf32, #tpu.memory_space<vmem>>, %arg10: memref<1x8x32xf32, #tpu.memory_space<vmem>>) attributes {dimension_semantics = [#tpu.dimension_semantics<parallel>, #tpu.dimension_semantics<parallel>], iteration_bounds = array<i64: 2, 1>, scalar_prefetch = 0 : i64, scratch_operands = 0 : i64, tpu.core_type = #tpu.core_type<tc>, window_params = [{transform_indices = @transform_0, window_bounds = array<i64: 1, 8, 32>}, {transform_indices = @transform_1, window_bounds = array<i64: 1, 1, 8>}, {transform_indices = @transform_2, window_bounds = array<i64: 32, 32>}, {transform_indices = @transform_3, window_bounds = array<i64: 1, 32>}, {transform_indices = @transform_4, window_bounds = array<i64: 32, 32>}, {transform_indices = @transform_5, window_bounds = array<i64: 1, 32>}, {transform_indices = @transform_6, window_bounds = array<i64: 32, 32>}, {transform_indices = @transform_7, window_bounds = array<i64: 1, 32>}, {transform_indices = @transform_8, window_bounds = array<i64: 1, 8, 32>}]} {
    %c0 = arith.constant 0 : index
    %c0_0 = arith.constant 0 : index
    %c0_1 = arith.constant 0 : index
    %0 = vector.load %arg2[%c0, %c0_0, %c0_1] : memref<1x8x32xf32, #tpu.memory_space<vmem>>, vector<1x8x32xf32>
    %1 = vector.shape_cast %0 : vector<1x8x32xf32> to vector<8x32xf32>
    %c0_2 = arith.constant 0 : index
    %c0_3 = arith.constant 0 : index
    %2 = vector.load %arg4[%c0_2, %c0_3] : memref<32x32xf32, #tpu.memory_space<vmem>>, vector<32x32xf32>
    %cst = arith.constant dense<0.000000e+00> : vector<8x32xf32>
    %3 = tpu.matmul %1, %2, %cst {dimension_numbers = #tpu.dot_dimension_numbers<[1], [1], [0], [0], [0, 0, 1, 0], [], []>} : vector<8x32xf32>, vector<32x32xf32>, vector<8x32xf32> -> vector<8x32xf32>
    %c0_4 = arith.constant 0 : index
    %c0_5 = arith.constant 0 : index
    %4 = vector.load %arg5[%c0_4, %c0_5] : memref<1x32xf32, #tpu.memory_space<vmem>>, vector<1x32xf32>
    %5 = vector.broadcast %4 : vector<1x32xf32> to vector<8x32xf32>
    %6 = arith.addf %3, %5 : vector<8x32xf32>
    %cst_6 = arith.constant 0.353553385 : f32
    %7 = vector.broadcast %cst_6 : f32 to vector<8x32xf32>
    %8 = arith.mulf %6, %7 : vector<8x32xf32>
    %c0_7 = arith.constant 0 : index
    %c0_8 = arith.constant 0 : index
    %9 = vector.load %arg6[%c0_7, %c0_8] : memref<32x32xf32, #tpu.memory_space<vmem>>, vector<32x32xf32>
    %cst_9 = arith.constant dense<0.000000e+00> : vector<8x32xf32>
    %10 = tpu.matmul %1, %9, %cst_9 {dimension_numbers = #tpu.dot_dimension_numbers<[1], [1], [0], [0], [0, 0, 1, 0], [], []>} : vector<8x32xf32>, vector<32x32xf32>, vector<8x32xf32> -> vector<8x32xf32>
    %c0_10 = arith.constant 0 : index
    %c0_11 = arith.constant 0 : index
    %11 = vector.load %arg7[%c0_10, %c0_11] : memref<1x32xf32, #tpu.memory_space<vmem>>, vector<1x32xf32>
    %12 = vector.broadcast %11 : vector<1x32xf32> to vector<8x32xf32>
    %13 = arith.addf %10, %12 : vector<8x32xf32>
    %c0_12 = arith.constant 0 : index
    %c0_13 = arith.constant 0 : index
    %14 = vector.load %arg8[%c0_12, %c0_13] : memref<32x32xf32, #tpu.memory_space<vmem>>, vector<32x32xf32>
    %cst_14 = arith.constant dense<0.000000e+00> : vector<8x32xf32>
    %15 = tpu.matmul %1, %14, %cst_14 {dimension_numbers = #tpu.dot_dimension_numbers<[1], [1], [0], [0], [0, 0, 1, 0], [], []>} : vector<8x32xf32>, vector<32x32xf32>, vector<8x32xf32> -> vector<8x32xf32>
    %c0_15 = arith.constant 0 : index
    %c0_16 = arith.constant 0 : index
    %16 = vector.load %arg9[%c0_15, %c0_16] : memref<1x32xf32, #tpu.memory_space<vmem>>, vector<1x32xf32>
    %17 = vector.broadcast %16 : vector<1x32xf32> to vector<8x32xf32>
    %18 = arith.addf %15, %17 : vector<8x32xf32>
    %c0_17 = arith.constant 0 : index
    %c0_18 = arith.constant 0 : index
    %c0_19 = arith.constant 0 : index
    %19 = vector.load %arg3[%c0_17, %c0_18, %c0_19] : memref<1x1x8xf32, #tpu.memory_space<vmem>>, vector<1x1x8xf32>
    %20 = vector.shape_cast %19 : vector<1x1x8xf32> to vector<1x8xf32>
    %21 = vector.extract_strided_slice %8 {offsets = [0, 0], sizes = [8, 8], strides = [1, 1]} : vector<8x32xf32> to vector<8x8xf32>
    %22 = vector.extract_strided_slice %13 {offsets = [0, 0], sizes = [8, 8], strides = [1, 1]} : vector<8x32xf32> to vector<8x8xf32>
    %23 = vector.extract_strided_slice %18 {offsets = [0, 0], sizes = [8, 8], strides = [1, 1]} : vector<8x32xf32> to vector<8x8xf32>
    %cst_20 = arith.constant dense<0.000000e+00> : vector<8x8xf32>
    %24 = tpu.matmul %21, %22, %cst_20 {dimension_numbers = #tpu.dot_dimension_numbers<[1], [1], [0], [0], [0, 0, 1, 0], [], []>} : vector<8x8xf32>, vector<8x8xf32>, vector<8x8xf32> -> vector<8x8xf32>
    %25 = vector.broadcast %20 : vector<1x8xf32> to vector<8x8xf32>
    %26 = arith.addf %24, %25 : vector<8x8xf32>
    %cst_21 = arith.constant dense<0xFF800000> : vector<8xf32>
    %27 = vector.multi_reduction <maximumf>, %26, %cst_21 [1] : vector<8x8xf32> to vector<8xf32>
    %28 = vector.shape_cast %27 : vector<8xf32> to vector<8x1xf32>
    %29 = vector.broadcast %28 : vector<8x1xf32> to vector<8x8xf32>
    %30 = arith.subf %26, %29 : vector<8x8xf32>
    %31 = math.exp %30 : vector<8x8xf32>
    %cst_22 = arith.constant dense<0.000000e+00> : vector<8xf32>
    %32 = vector.multi_reduction <add>, %31, %cst_22 [1] : vector<8x8xf32> to vector<8xf32>
    %33 = vector.shape_cast %32 : vector<8xf32> to vector<8x1xf32>
    %cst_23 = arith.constant dense<0.000000e+00> : vector<8x8xf32>
    %34 = tpu.matmul %31, %23, %cst_23 {dimension_numbers = #tpu.dot_dimension_numbers<[1], [0], [0], [1], [0, 0, 1, 1], [], []>} : vector<8x8xf32>, vector<8x8xf32>, vector<8x8xf32> -> vector<8x8xf32>
    %35 = tpu.reciprocal %33 : vector<8x1xf32> -> vector<8x1xf32>
    %36 = vector.broadcast %35 : vector<8x1xf32> to vector<8x8xf32>
    %37 = arith.mulf %34, %36 : vector<8x8xf32>
    %38 = vector.extract_strided_slice %8 {offsets = [0, 8], sizes = [8, 8], strides = [1, 1]} : vector<8x32xf32> to vector<8x8xf32>
    %39 = vector.extract_strided_slice %13 {offsets = [0, 8], sizes = [8, 8], strides = [1, 1]} : vector<8x32xf32> to vector<8x8xf32>
    %40 = vector.extract_strided_slice %18 {offsets = [0, 8], sizes = [8, 8], strides = [1, 1]} : vector<8x32xf32> to vector<8x8xf32>
    %cst_24 = arith.constant dense<0.000000e+00> : vector<8x8xf32>
    %41 = tpu.matmul %38, %39, %cst_24 {dimension_numbers = #tpu.dot_dimension_numbers<[1], [1], [0], [0], [0, 0, 1, 0], [], []>} : vector<8x8xf32>, vector<8x8xf32>, vector<8x8xf32> -> vector<8x8xf32>
    %42 = vector.broadcast %20 : vector<1x8xf32> to vector<8x8xf32>
    %43 = arith.addf %41, %42 : vector<8x8xf32>
    %cst_25 = arith.constant dense<0xFF800000> : vector<8xf32>
    %44 = vector.multi_reduction <maximumf>, %43, %cst_25 [1] : vector<8x8xf32> to vector<8xf32>
    %45 = vector.shape_cast %44 : vector<8xf32> to vector<8x1xf32>
    %46 = vector.broadcast %45 : vector<8x1xf32> to vector<8x8xf32>
    %47 = arith.subf %43, %46 : vector<8x8xf32>
    %48 = math.exp %47 : vector<8x8xf32>
    %cst_26 = arith.constant dense<0.000000e+00> : vector<8xf32>
    %49 = vector.multi_reduction <add>, %48, %cst_26 [1] : vector<8x8xf32> to vector<8xf32>
    %50 = vector.shape_cast %49 : vector<8xf32> to vector<8x1xf32>
    %cst_27 = arith.constant dense<0.000000e+00> : vector<8x8xf32>
    %51 = tpu.matmul %48, %40, %cst_27 {dimension_numbers = #tpu.dot_dimension_numbers<[1], [0], [0], [1], [0, 0, 1, 1], [], []>} : vector<8x8xf32>, vector<8x8xf32>, vector<8x8xf32> -> vector<8x8xf32>
    %52 = tpu.reciprocal %50 : vector<8x1xf32> -> vector<8x1xf32>
    %53 = vector.broadcast %52 : vector<8x1xf32> to vector<8x8xf32>
    %54 = arith.mulf %51, %53 : vector<8x8xf32>
    %55 = vector.extract_strided_slice %8 {offsets = [0, 16], sizes = [8, 8], strides = [1, 1]} : vector<8x32xf32> to vector<8x8xf32>
    %56 = vector.extract_strided_slice %13 {offsets = [0, 16], sizes = [8, 8], strides = [1, 1]} : vector<8x32xf32> to vector<8x8xf32>
    %57 = vector.extract_strided_slice %18 {offsets = [0, 16], sizes = [8, 8], strides = [1, 1]} : vector<8x32xf32> to vector<8x8xf32>
    %cst_28 = arith.constant dense<0.000000e+00> : vector<8x8xf32>
    %58 = tpu.matmul %55, %56, %cst_28 {dimension_numbers = #tpu.dot_dimension_numbers<[1], [1], [0], [0], [0, 0, 1, 0], [], []>} : vector<8x8xf32>, vector<8x8xf32>, vector<8x8xf32> -> vector<8x8xf32>
    %59 = vector.broadcast %20 : vector<1x8xf32> to vector<8x8xf32>
    %60 = arith.addf %58, %59 : vector<8x8xf32>
    %cst_29 = arith.constant dense<0xFF800000> : vector<8xf32>
    %61 = vector.multi_reduction <maximumf>, %60, %cst_29 [1] : vector<8x8xf32> to vector<8xf32>
    %62 = vector.shape_cast %61 : vector<8xf32> to vector<8x1xf32>
    %63 = vector.broadcast %62 : vector<8x1xf32> to vector<8x8xf32>
    %64 = arith.subf %60, %63 : vector<8x8xf32>
    %65 = math.exp %64 : vector<8x8xf32>
    %cst_30 = arith.constant dense<0.000000e+00> : vector<8xf32>
    %66 = vector.multi_reduction <add>, %65, %cst_30 [1] : vector<8x8xf32> to vector<8xf32>
    %67 = vector.shape_cast %66 : vector<8xf32> to vector<8x1xf32>
    %cst_31 = arith.constant dense<0.000000e+00> : vector<8x8xf32>
    %68 = tpu.matmul %65, %57, %cst_31 {dimension_numbers = #tpu.dot_dimension_numbers<[1], [0], [0], [1], [0, 0, 1, 1], [], []>} : vector<8x8xf32>, vector<8x8xf32>, vector<8x8xf32> -> vector<8x8xf32>
    %69 = tpu.reciprocal %67 : vector<8x1xf32> -> vector<8x1xf32>
    %70 = vector.broadcast %69 : vector<8x1xf32> to vector<8x8xf32>
    %71 = arith.mulf %68, %70 : vector<8x8xf32>
    %72 = vector.extract_strided_slice %8 {offsets = [0, 24], sizes = [8, 8], strides = [1, 1]} : vector<8x32xf32> to vector<8x8xf32>
    %73 = vector.extract_strided_slice %13 {offsets = [0, 24], sizes = [8, 8], strides = [1, 1]} : vector<8x32xf32> to vector<8x8xf32>
    %74 = vector.extract_strided_slice %18 {offsets = [0, 24], sizes = [8, 8], strides = [1, 1]} : vector<8x32xf32> to vector<8x8xf32>
    %cst_32 = arith.constant dense<0.000000e+00> : vector<8x8xf32>
    %75 = tpu.matmul %72, %73, %cst_32 {dimension_numbers = #tpu.dot_dimension_numbers<[1], [1], [0], [0], [0, 0, 1, 0], [], []>} : vector<8x8xf32>, vector<8x8xf32>, vector<8x8xf32> -> vector<8x8xf32>
    %76 = vector.broadcast %20 : vector<1x8xf32> to vector<8x8xf32>
    %77 = arith.addf %75, %76 : vector<8x8xf32>
    %cst_33 = arith.constant dense<0xFF800000> : vector<8xf32>
    %78 = vector.multi_reduction <maximumf>, %77, %cst_33 [1] : vector<8x8xf32> to vector<8xf32>
    %79 = vector.shape_cast %78 : vector<8xf32> to vector<8x1xf32>
    %80 = vector.broadcast %79 : vector<8x1xf32> to vector<8x8xf32>
    %81 = arith.subf %77, %80 : vector<8x8xf32>
    %82 = math.exp %81 : vector<8x8xf32>
    %cst_34 = arith.constant dense<0.000000e+00> : vector<8xf32>
    %83 = vector.multi_reduction <add>, %82, %cst_34 [1] : vector<8x8xf32> to vector<8xf32>
    %84 = vector.shape_cast %83 : vector<8xf32> to vector<8x1xf32>
    %cst_35 = arith.constant dense<0.000000e+00> : vector<8x8xf32>
    %85 = tpu.matmul %82, %74, %cst_35 {dimension_numbers = #tpu.dot_dimension_numbers<[1], [0], [0], [1], [0, 0, 1, 1], [], []>} : vector<8x8xf32>, vector<8x8xf32>, vector<8x8xf32> -> vector<8x8xf32>
    %86 = tpu.reciprocal %84 : vector<8x1xf32> -> vector<8x1xf32>
    %87 = vector.broadcast %86 : vector<8x1xf32> to vector<8x8xf32>
    %88 = arith.mulf %85, %87 : vector<8x8xf32>
    %89 = tpu.concatenate %37, %54, %71, %88 in 1 : vector<8x8xf32>, vector<8x8xf32>, vector<8x8xf32>, vector<8x8xf32> -> vector<8x32xf32>
    %c0_36 = arith.constant 0 : index
    %c0_37 = arith.constant 0 : index
    %c0_38 = arith.constant 0 : index
    %90 = vector.load %arg10[%c0_36, %c0_37, %c0_38] : memref<1x8x32xf32, #tpu.memory_space<vmem>>, vector<1x8x32xf32>
    %91 = vector.shape_cast %90 : vector<1x8x32xf32> to vector<8x32xf32>
    %92 = vector.shape_cast %89 : vector<8x32xf32> to vector<1x8x32xf32>
    tpu.vector_store %arg10[%c0_36, %c0_37, %c0_38], %92 {strides = array<i32>} : memref<1x8x32xf32, #tpu.memory_space<vmem>>, vector<1x8x32xf32>,
    return
  }
  func.func @transform_0(%arg0: i32, %arg1: i32) -> (i32, i32, i32) {
    %c0_i32 = arith.constant 0 : i32
    %c0_i32_0 = arith.constant 0 : i32
    %c0_i32_1 = arith.constant 0 : i32
    return %arg0, %c0_i32, %c0_i32_0 : i32, i32, i32
  }
  func.func @transform_1(%arg0: i32, %arg1: i32) -> (i32, i32, i32) {
    %c0_i32 = arith.constant 0 : i32
    %c0_i32_0 = arith.constant 0 : i32
    %c0_i32_1 = arith.constant 0 : i32
    return %arg0, %c0_i32, %c0_i32_0 : i32, i32, i32
  }
  func.func @transform_2(%arg0: i32, %arg1: i32) -> (i32, i32) {
    %c0_i32 = arith.constant 0 : i32
    %c0_i32_0 = arith.constant 0 : i32
    return %arg1, %c0_i32 : i32, i32
  }
  func.func @transform_3(%arg0: i32, %arg1: i32) -> (i32, i32) {
    %c0_i32 = arith.constant 0 : i32
    %c0_i32_0 = arith.constant 0 : i32
    return %c0_i32, %arg1 : i32, i32
  }
  func.func @transform_4(%arg0: i32, %arg1: i32) -> (i32, i32) {
    %c0_i32 = arith.constant 0 : i32
    %c0_i32_0 = arith.constant 0 : i32
    return %arg1, %c0_i32 : i32, i32
  }
  func.func @transform_5(%arg0: i32, %arg1: i32) -> (i32, i32) {
    %c0_i32 = arith.constant 0 : i32
    %c0_i32_0 = arith.constant 0 : i32
    return %c0_i32, %arg1 : i32, i32
  }
  func.func @transform_6(%arg0: i32, %arg1: i32) -> (i32, i32) {
    %c0_i32 = arith.constant 0 : i32
    %c0_i32_0 = arith.constant 0 : i32
    return %arg1, %c0_i32 : i32, i32
  }
  func.func @transform_7(%arg0: i32, %arg1: i32) -> (i32, i32) {
    %c0_i32 = arith.constant 0 : i32
    %c0_i32_0 = arith.constant 0 : i32
    return %c0_i32, %arg1 : i32, i32
  }
  func.func @transform_8(%arg0: i32, %arg1: i32) -> (i32, i32, i32) {
    %c0_i32 = arith.constant 0 : i32
    %c0_i32_0 = arith.constant 0 : i32
    return %arg0, %c0_i32, %arg1 : i32, i32, i32
  }
}

</mosaic_0001>

<llo_original>
// kernel: tpu_custom_call.1
$region0: #{tpu_custom_call.1}
  #allocation0 [shape = 'u32[]', space=smem, size = 0x4, offset = 0x4, fixed_abs, tag = 'smem constant byte address 0x4 - core index']
  #allocation1 [shape = 'u32[144,128]{1,0:T(1,128)}', space=vmem, size = 0x12000, scoped, tag = 'internal scratch']
  %s0 = inlined_call_operand.hbm [shape: f32[2,8,32], index: 0, kind: input, shape index: {}]
  %s1 = inlined_call_operand.vmem [shape: f32[2,1,8], index: 1, kind: input, shape index: {}]
  %s2 = inlined_call_operand.hbm [shape: f32[32,32], index: 2, kind: input, shape index: {}]
  %s3 = inlined_call_operand.vmem [shape: f32[1,32], index: 3, kind: input, shape index: {}]
  %s4 = inlined_call_operand.hbm [shape: f32[32,32], index: 4, kind: input, shape index: {}]
  %s5 = inlined_call_operand.vmem [shape: f32[1,32], index: 5, kind: input, shape index: {}]
  %s6 = inlined_call_operand.hbm [shape: f32[32,32], index: 6, kind: input, shape index: {}]
  %s7 = inlined_call_operand.vmem [shape: f32[1,32], index: 7, kind: input, shape index: {}]
  %s8 = inlined_call_operand.hbm [shape: f32[2,8,32], index: 8, kind: output, shape index: {}]
  %s9 = sld [smem:[#allocation0]]
  $region81: #{tpu_custom_call.1} parent=0
    _
  %s11 = ssub.s32 1, %s9
  %s12 = scalar_select 0, %s11, %s9
  $region1: #{tpu_custom_call.1} parent=0
    #allocation2 [shape = 'u8[8192]{0}', space=vmem, size = 0x2000, scoped, tag = 'input window, operand 0']
    #allocation3 [shape = 's32[2]{0}', space=sflag, size = 0x8, scoped, tag = 'scoped memory for tpu_custom_call.1']
    #allocation4 [shape = 's32[2]{0}', space=sflag, size = 0x8, scoped, tag = 'scoped memory for tpu_custom_call.1']
    #allocation5 [shape = 'u8[16384]{0}', space=vmem, size = 0x4000, scoped, tag = 'input window, operand 2, single buffered']
    #allocation6 [shape = 's32[1]{0}', space=sflag, size = 0x4, scoped, tag = 'scoped memory for tpu_custom_call.1']
    #allocation7 [shape = 'u8[16384]{0}', space=vmem, size = 0x4000, scoped, tag = 'input window, operand 4, single buffered']
    #allocation8 [shape = 'u8[16384]{0}', space=vmem, size = 0x4000, scoped, tag = 'input window, operand 6, single buffered']
    #allocation9 [shape = 's32[1]{0}', space=sflag, size = 0x4, scoped, tag = 'scoped memory for tpu_custom_call.1']
    #allocation10 [shape = 'u8[8192]{0}', space=vmem, size = 0x2000, scoped, tag = 'output window, operand 0']
    %13 = vsyncpa [#allocation3], 0
    %s14 = scalar_lea.sflag [#allocation3], 1
    %15 = vsyncpa %s14, 0
    %16 = vsyncpa [#allocation6], 0
    %17 = vsyncpa [#allocation9], 0
    %18 = vsyncpa [#allocation4], 0
    %s19 = scalar_lea.sflag [#allocation4], 1
    %20 = vsyncpa %s19, 0
    loop: start=0, step=1, limit=4
    $region2: #{tpu_custom_call.1} parent=1 // loop_pre_header
      _
    $region3: #{tpu_custom_call.1} parent=1 // loop_header
      %s22 = sphi 0, %s26
      %p23 = scmp.ge.s32.totalorder %s22, 4
      %s29 = sphi 0, %s41
      %s30 = sphi 0, %s37
      %s31 = sphi 0, %s29
      %s32 = sphi 0, %s30
      %s33 = sphi 0, %s31
      %s34 = sphi 0, %s32
      %s44 = sphi 0, %s46
      %s47 = sphi 0, %s44
      %s48 = sphi 0, %s47
      %s64 = sphi 0, %s48
      %s70 = sphi 0, %s72
      %s73 = sphi 0, %s70
      %s74 = sphi 0, %s73
      %s90 = sphi 0, %s74
      %s96 = sphi 0, %s98
      %s99 = sphi 0, %s96
      %s100 = sphi 0, %s99
      %s116 = sphi 0, %s100
      %s122 = sphi 0, %s124
      %s125 = sphi 0, %s122
      %s126 = sphi 0, %s125
      %s142 = sphi 0, %s126
      %s148 = sphi 0, %s150
      %s151 = sphi 0, %s148
      %s152 = sphi 0, %s151
      %s168 = sphi 0, %s152
      %s174 = sphi 0, %s176
      %s177 = sphi 0, %s174
      %s178 = sphi 0, %s177
      %s194 = sphi 0, %s178
      %s200 = sphi 0, %s202
      %s203 = sphi 0, %s200
      %s204 = sphi 0, %s203
      %s220 = sphi 0, %s204
      %s226 = sphi 0, %s228
      %s229 = sphi 0, %s226
      %s230 = sphi 0, %s229
      %s246 = sphi 0, %s230
      %s254 = sphi 0, %s256
      %s257 = sphi 0, %s254
      %s258 = sphi 0, %s257
      %s274 = sphi 0, %s258
    $region4: #{tpu_custom_call.1} parent=1 // loop_header_branch
      %25 = sbr.rel (%p23) target = $region8
    $region5: #{tpu_custom_call.1} parent=1 // loop_body
      %s27 = ssub.s32 %s22, 1
      %s28 = ssub.s32 %s22, 2
      %s35 = sadd.s32 1, %s30
      %p36 = scmp.ge.s32.totalorder %s35, 1
      %s37 = scalar_select %p36, 0, %s35
      %s38 = sadd.s32 1, %s29
      %s39 = scalar_select %p36, %s38, %s29
      %p40 = scmp.ge.s32.totalorder %s39, 2
      %s41 = scalar_select %p40, 0, %s39
      %s42 = ssub.s32 %s29, %s41
      %p43 = scmp.eq.s32.totalorder %s42, 0
      %s45 = sadd.s32 %s44, 1
      %s46 = scalar_select %p43, %s44, %s45
      %p49 = pneg %p43
      %p50 = scmp.eq.s32.totalorder %s22, 1
      %p51 = por %p49, %p50
      %p52 = scmp.ne.s32.totalorder %s44, %s47
      %p53 = scmp.eq.s32.totalorder %s22, 0
      %p54 = por %p52, %p53
      %p55 = scmp.ne.s32.totalorder %s44, %s47
      %p56 = scmp.eq.s32.totalorder %s27, 1
      %p57 = por %p55, %p56
      %p58 = scmp.ne.s32.totalorder %s47, %s48
      %p59 = scmp.eq.s32.totalorder %s27, 0
      %p60 = por %p58, %p59
      %p61 = scmp.ne.s32.totalorder %s47, %s48
      %p62 = scmp.eq.s32.totalorder %s28, 1
      %p63 = por %p61, %p62
      %p65 = scmp.ne.s32.totalorder %s48, %s64
      %p66 = scmp.eq.s32.totalorder %s28, 0
      %p67 = por %p65, %p66
      %s68 = ssub.s32 %s29, %s41
      %p69 = scmp.eq.s32.totalorder %s68, 0
      %s71 = sadd.s32 %s70, 1
      %s72 = scalar_select %p69, %s70, %s71
      %p75 = pneg %p69
      %p76 = scmp.eq.s32.totalorder %s22, 1
      %p77 = por %p75, %p76
      %p78 = scmp.ne.s32.totalorder %s70, %s73
      %p79 = scmp.eq.s32.totalorder %s22, 0
      %p80 = por %p78, %p79
      %p81 = scmp.ne.s32.totalorder %s70, %s73
      %p82 = scmp.eq.s32.totalorder %s27, 1
      %p83 = por %p81, %p82
      %p84 = scmp.ne.s32.totalorder %s73, %s74
      %p85 = scmp.eq.s32.totalorder %s27, 0
      %p86 = por %p84, %p85
      %p87 = scmp.ne.s32.totalorder %s73, %s74
      %p88 = scmp.eq.s32.totalorder %s28, 1
      %p89 = por %p87, %p88
      %p91 = scmp.ne.s32.totalorder %s74, %s90
      %p92 = scmp.eq.s32.totalorder %s28, 0
      %p93 = por %p91, %p92
      %s94 = ssub.s32 %s30, %s37
      %p95 = scmp.eq.s32.totalorder %s94, 0
      %s97 = sadd.s32 %s96, 1
      %s98 = scalar_select %p95, %s96, %s97
      %p101 = pneg %p95
      %p102 = scmp.eq.s32.totalorder %s22, 1
      %p103 = por %p101, %p102
      %p104 = scmp.ne.s32.totalorder %s96, %s99
      %p105 = scmp.eq.s32.totalorder %s22, 0
      %p106 = por %p104, %p105
      %p107 = scmp.ne.s32.totalorder %s96, %s99
      %p108 = scmp.eq.s32.totalorder %s27, 1
      %p109 = por %p107, %p108
      %p110 = scmp.ne.s32.totalorder %s99, %s100
      %p111 = scmp.eq.s32.totalorder %s27, 0
      %p112 = por %p110, %p111
      %p113 = scmp.ne.s32.totalorder %s99, %s100
      %p114 = scmp.eq.s32.totalorder %s28, 1
      %p115 = por %p113, %p114
      %p117 = scmp.ne.s32.totalorder %s100, %s116
      %p118 = scmp.eq.s32.totalorder %s28, 0
      %p119 = por %p117, %p118
      %s120 = ssub.s32 %s30, %s37
      %p121 = scmp.eq.s32.totalorder %s120, 0
      %s123 = sadd.s32 %s122, 1
      %s124 = scalar_select %p121, %s122, %s123
      %p127 = pneg %p121
      %p128 = scmp.eq.s32.totalorder %s22, 1
      %p129 = por %p127, %p128
      %p130 = scmp.ne.s32.totalorder %s122, %s125
      %p131 = scmp.eq.s32.totalorder %s22, 0
      %p132 = por %p130, %p131
      %p133 = scmp.ne.s32.totalorder %s122, %s125
      %p134 = scmp.eq.s32.totalorder %s27, 1
      %p135 = por %p133, %p134
      %p136 = scmp.ne.s32.totalorder %s125, %s126
      %p137 = scmp.eq.s32.totalorder %s27, 0
      %p138 = por %p136, %p137
      %p139 = scmp.ne.s32.totalorder %s125, %s126
      %p140 = scmp.eq.s32.totalorder %s28, 1
      %p141 = por %p139, %p140
      %p143 = scmp.ne.s32.totalorder %s126, %s142
      %p144 = scmp.eq.s32.totalorder %s28, 0
      %p145 = por %p143, %p144
      %s146 = ssub.s32 %s30, %s37
      %p147 = scmp.eq.s32.totalorder %s146, 0
      %s149 = sadd.s32 %s148, 1
      %s150 = scalar_select %p147, %s148, %s149
      %p153 = pneg %p147
      %p154 = scmp.eq.s32.totalorder %s22, 1
      %p155 = por %p153, %p154
      %p156 = scmp.ne.s32.totalorder %s148, %s151
      %p157 = scmp.eq.s32.totalorder %s22, 0
      %p158 = por %p156, %p157
      %p159 = scmp.ne.s32.totalorder %s148, %s151
      %p160 = scmp.eq.s32.totalorder %s27, 1
      %p161 = por %p159, %p160
      %p162 = scmp.ne.s32.totalorder %s151, %s152
      %p163 = scmp.eq.s32.totalorder %s27, 0
      %p164 = por %p162, %p163
      %p165 = scmp.ne.s32.totalorder %s151, %s152
      %p166 = scmp.eq.s32.totalorder %s28, 1
      %p167 = por %p165, %p166
      %p169 = scmp.ne.s32.totalorder %s152, %s168
      %p170 = scmp.eq.s32.totalorder %s28, 0
      %p171 = por %p169, %p170
      %s172 = ssub.s32 %s30, %s37
      %p173 = scmp.eq.s32.totalorder %s172, 0
      %s175 = sadd.s32 %s174, 1
      %s176 = scalar_select %p173, %s174, %s175
      %p179 = pneg %p173
      %p180 = scmp.eq.s32.totalorder %s22, 1
      %p181 = por %p179, %p180
      %p182 = scmp.ne.s32.totalorder %s174, %s177
      %p183 = scmp.eq.s32.totalorder %s22, 0
      %p184 = por %p182, %p183
      %p185 = scmp.ne.s32.totalorder %s174, %s177
      %p186 = scmp.eq.s32.totalorder %s27, 1
      %p187 = por %p185, %p186
      %p188 = scmp.ne.s32.totalorder %s177, %s178
      %p189 = scmp.eq.s32.totalorder %s27, 0
      %p190 = por %p188, %p189
      %p191 = scmp.ne.s32.totalorder %s177, %s178
      %p192 = scmp.eq.s32.totalorder %s28, 1
      %p193 = por %p191, %p192
      %p195 = scmp.ne.s32.totalorder %s178, %s194
      %p196 = scmp.eq.s32.totalorder %s28, 0
      %p197 = por %p195, %p196
      %s198 = ssub.s32 %s30, %s37
      %p199 = scmp.eq.s32.totalorder %s198, 0
      %s201 = sadd.s32 %s200, 1
      %s202 = scalar_select %p199, %s200, %s201
      %p205 = pneg %p199
      %p206 = scmp.eq.s32.totalorder %s22, 1
      %p207 = por %p205, %p206
      %p208 = scmp.ne.s32.totalorder %s200, %s203
      %p209 = scmp.eq.s32.totalorder %s22, 0
      %p210 = por %p208, %p209
      %p211 = scmp.ne.s32.totalorder %s200, %s203
      %p212 = scmp.eq.s32.totalorder %s27, 1
      %p213 = por %p211, %p212
      %p214 = scmp.ne.s32.totalorder %s203, %s204
      %p215 = scmp.eq.s32.totalorder %s27, 0
      %p216 = por %p214, %p215
      %p217 = scmp.ne.s32.totalorder %s203, %s204
      %p218 = scmp.eq.s32.totalorder %s28, 1
      %p219 = por %p217, %p218
      %p221 = scmp.ne.s32.totalorder %s204, %s220
      %p222 = scmp.eq.s32.totalorder %s28, 0
      %p223 = por %p221, %p222
      %s224 = ssub.s32 %s30, %s37
      %p225 = scmp.eq.s32.totalorder %s224, 0
      %s227 = sadd.s32 %s226, 1
      %s228 = scalar_select %p225, %s226, %s227
      %p231 = pneg %p225
      %p232 = scmp.eq.s32.totalorder %s22, 1
      %p233 = por %p231, %p232
      %p234 = scmp.ne.s32.totalorder %s226, %s229
      %p235 = scmp.eq.s32.totalorder %s22, 0
      %p236 = por %p234, %p235
      %p237 = scmp.ne.s32.totalorder %s226, %s229
      %p238 = scmp.eq.s32.totalorder %s27, 1
      %p239 = por %p237, %p238
      %p240 = scmp.ne.s32.totalorder %s229, %s230
      %p241 = scmp.eq.s32.totalorder %s27, 0
      %p242 = por %p240, %p241
      %p243 = scmp.ne.s32.totalorder %s229, %s230
      %p244 = scmp.eq.s32.totalorder %s28, 1
      %p245 = por %p243, %p244
      %p247 = scmp.ne.s32.totalorder %s230, %s246
      %p248 = scmp.eq.s32.totalorder %s28, 0
      %p249 = por %p247, %p248
      %s250 = ssub.s32 %s29, %s41
      %s251 = ssub.s32 %s30, %s37
      %s252 = sor.u32 %s250, %s251
      %p253 = scmp.eq.s32.totalorder %s252, 0
      %s255 = sadd.s32 %s254, 1
      %s256 = scalar_select %p253, %s254, %s255
      %p259 = pneg %p253
      %p260 = scmp.eq.s32.totalorder %s22, 1
      %p261 = por %p259, %p260
      %p262 = scmp.ne.s32.totalorder %s254, %s257
      %p263 = scmp.eq.s32.totalorder %s22, 0
      %p264 = por %p262, %p263
      %p265 = scmp.ne.s32.totalorder %s254, %s257
      %p266 = scmp.eq.s32.totalorder %s27, 1
      %p267 = por %p265, %p266
      %p268 = scmp.ne.s32.totalorder %s257, %s258
      %p269 = scmp.eq.s32.totalorder %s27, 0
      %p270 = por %p268, %p269
      %p271 = scmp.ne.s32.totalorder %s257, %s258
      %p272 = scmp.eq.s32.totalorder %s28, 1
      %p273 = por %p271, %p272
      %p275 = scmp.ne.s32.totalorder %s258, %s274
      %p276 = scmp.eq.s32.totalorder %s28, 0
      %p277 = por %p275, %p276
      %p278 = scmp.le.s32.totalorder 1, %s22
      %p279 = scmp.lt.s32.totalorder %s22, 3
      %p280 = pnand %p278, %p279
      %p281 = pneg %p280
      // Predicated region
      $region9: #{tpu_custom_call.1} parent=5 // pred_check
        _
      $region10: #{tpu_custom_call.1} parent=5 // pred_check_branch
        %283 = sbr.rel (%p280) target = $region12
      $region11: #{tpu_custom_call.1} parent=5 // pred_region
        %s284 = ssub.s32 %s22, 1
        // Predicated region
        $region13: #{tpu_custom_call.1} parent=11 // pred_check
          %p285 = pneg %p112
        $region14: #{tpu_custom_call.1} parent=11 // pred_check_branch
          %287 = sbr.rel (%p285) target = $region16
        $region15: #{tpu_custom_call.1} parent=11 // pred_region
          %s288 = smul.u32 4, %s32
          %s290 = ssub.s32 512, 512
          %291 = vsyncadd [#allocation6], %s290
          %s292 = smul.addr %s288, 128
          %s293 = scalar_lea.hbm %s2, %s292
          %s294 = sshll.u32 [#allocation5], 4
          %s295 = int_to_ptr.vmem [resolvable:$true] %s294
          %300 = dma.hbm_to_vmem [thread:$0]  %s293, 512, %s295, [#allocation6], 128, 128, 8
        $region16: #{tpu_custom_call.1} parent=11 // pred_fallthru
          _
        // Predicated region
        $region17: #{tpu_custom_call.1} parent=11 // pred_check
          %p301 = pneg %p138
        $region18: #{tpu_custom_call.1} parent=11 // pred_check_branch
          %303 = sbr.rel (%p301) target = $region20
        $region19: #{tpu_custom_call.1} parent=11 // pred_region
          %p304 = scmp.lt.s32.totalorder %s32, 0
          %s305 = scalar_select %p304, %s32, 0
          %s306 = scalar_lea.vmem %s3, %s305
        $region20: #{tpu_custom_call.1} parent=11 // pred_fallthru
          _
        // Predicated region
        $region21: #{tpu_custom_call.1} parent=11 // pred_check
          %p307 = pneg %p164
        $region22: #{tpu_custom_call.1} parent=11 // pred_check_branch
          %309 = sbr.rel (%p307) target = $region24
        $region23: #{tpu_custom_call.1} parent=11 // pred_region
          %s310 = smul.u32 4, %s32
          %s312 = ssub.s32 512, 512
          %313 = vsyncadd [#allocation6], %s312
          %s314 = smul.addr %s310, 128
          %s315 = scalar_lea.hbm %s4, %s314
          %s316 = sshll.u32 [#allocation7], 4
          %s317 = int_to_ptr.vmem [resolvable:$true] %s316
          %322 = dma.hbm_to_vmem [thread:$0]  %s315, 512, %s317, [#allocation6], 128, 128, 8
        $region24: #{tpu_custom_call.1} parent=11 // pred_fallthru
          _
        // Predicated region
        $region25: #{tpu_custom_call.1} parent=11 // pred_check
          %p323 = pneg %p190
        $region26: #{tpu_custom_call.1} parent=11 // pred_check_branch
          %325 = sbr.rel (%p323) target = $region28
        $region27: #{tpu_custom_call.1} parent=11 // pred_region
          %p326 = scmp.lt.s32.totalorder %s32, 0
          %s327 = scalar_select %p326, %s32, 0
          %s328 = scalar_lea.vmem %s5, %s327
        $region28: #{tpu_custom_call.1} parent=11 // pred_fallthru
          _
        // Predicated region
        $region29: #{tpu_custom_call.1} parent=11 // pred_check
          %p329 = pneg %p216
        $region30: #{tpu_custom_call.1} parent=11 // pred_check_branch
          %331 = sbr.rel (%p329) target = $region32
        $region31: #{tpu_custom_call.1} parent=11 // pred_region
          %s332 = smul.u32 4, %s32
          %s334 = ssub.s32 512, 512
          %335 = vsyncadd [#allocation9], %s334
          %s336 = smul.addr %s332, 128
          %s337 = scalar_lea.hbm %s6, %s336
          %s338 = sshll.u32 [#allocation8], 4
          %s339 = int_to_ptr.vmem [resolvable:$true] %s338
          %344 = dma.hbm_to_vmem [thread:$0]  %s337, 512, %s339, [#allocation9], 128, 128, 8
        $region32: #{tpu_custom_call.1} parent=11 // pred_fallthru
          _
        // Predicated region
        $region33: #{tpu_custom_call.1} parent=11 // pred_check
          %p345 = pneg %p242
        $region34: #{tpu_custom_call.1} parent=11 // pred_check_branch
          %347 = sbr.rel (%p345) target = $region36
        $region35: #{tpu_custom_call.1} parent=11 // pred_region
          %p348 = scmp.lt.s32.totalorder %s32, 0
          %s349 = scalar_select %p348, %s32, 0
          %s350 = scalar_lea.vmem %s7, %s349
        $region36: #{tpu_custom_call.1} parent=11 // pred_fallthru
          _
      $region12: #{tpu_custom_call.1} parent=5 // pred_fallthru
        _
      %p351 = scmp.lt.s32.totalorder %s22, 2
      // Predicated region
      $region37: #{tpu_custom_call.1} parent=5 // pred_check
        %p352 = pneg %p351
      $region38: #{tpu_custom_call.1} parent=5 // pred_check_branch
        %354 = sbr.rel (%p352) target = $region40
      $region39: #{tpu_custom_call.1} parent=5 // pred_region
        // Predicated region
        $region41: #{tpu_custom_call.1} parent=39 // pred_check
          %p355 = pneg %p54
        $region42: #{tpu_custom_call.1} parent=39 // pred_check_branch
          %357 = sbr.rel (%p355) target = $region44
        $region43: #{tpu_custom_call.1} parent=39 // pred_region
          %s358 = sand.u32 %s44, 1
          %s359 = scalar_lea.sflag [#allocation3], %s358
          %s360 = sand.u32 %s44, 1
          %s361 = smul.addr %s360, 8
          %s362 = scalar_lea.vmem [#allocation2], %s361
          %s364 = ssub.s32 128, 128
          %365 = vsyncadd %s359, %s364
          %s366 = smul.addr %s29, 128
          %s367 = scalar_lea.hbm %s0, %s366
          %s369 = sshll.u32 %s362, 4
          %s370 = int_to_ptr.vmem [resolvable:$true] %s369
          %372 = dma.hbm_to_vmem [thread:$0]  %s367, 128, %s370, %s359
        $region44: #{tpu_custom_call.1} parent=39 // pred_fallthru
          _
        // Predicated region
        $region45: #{tpu_custom_call.1} parent=39 // pred_check
          %p373 = pneg %p80
        $region46: #{tpu_custom_call.1} parent=39 // pred_check_branch
          %375 = sbr.rel (%p373) target = $region48
        $region47: #{tpu_custom_call.1} parent=39 // pred_region
          %p376 = scmp.lt.s32.totalorder %s29, 1
          %s377 = scalar_select %p376, %s29, 1
          %s378 = scalar_lea.vmem %s1, %s377
        $region48: #{tpu_custom_call.1} parent=39 // pred_fallthru
          _
      $region40: #{tpu_custom_call.1} parent=5 // pred_fallthru
        _
      %p379 = scmp.le.s32.totalorder 1, %s22
      %p380 = scmp.lt.s32.totalorder %s22, 3
      %p381 = pnand %p379, %p380
      %p382 = pneg %p381
      // Predicated region
      $region49: #{tpu_custom_call.1} parent=5 // pred_check
        _
      $region50: #{tpu_custom_call.1} parent=5 // pred_check_branch
        %384 = sbr.rel (%p381) target = $region52
      $region51: #{tpu_custom_call.1} parent=5 // pred_region
        %s385 = ssub.s32 %s22, 1
        %s386 = sand.u32 %s47, 1
        %s387 = scalar_lea.sflag [#allocation3], %s386
        %s388 = sand.u32 %s47, 1
        %s389 = smul.addr %s388, 8
        %s390 = scalar_lea.vmem [#allocation2], %s389
        // Predicated region
        $region53: #{tpu_custom_call.1} parent=51 // pred_check
          %p391 = pneg %p60
        $region54: #{tpu_custom_call.1} parent=51 // pred_check_branch
          %393 = sbr.rel (%p391) target = $region56
        $region55: #{tpu_custom_call.1} parent=51 // pred_region
          %394 = dma.done %s387, 128
        $region56: #{tpu_custom_call.1} parent=51 // pred_fallthru
          _
        // Predicated region
        $region57: #{tpu_custom_call.1} parent=51 // pred_check
          %p395 = pneg %p112
        $region58: #{tpu_custom_call.1} parent=51 // pred_check_branch
          %397 = sbr.rel (%p395) target = $region60
        $region59: #{tpu_custom_call.1} parent=51 // pred_region
          %398 = dma.done [#allocation6], 512
        $region60: #{tpu_custom_call.1} parent=51 // pred_fallthru
          _
        // Predicated region
        $region61: #{tpu_custom_call.1} parent=51 // pred_check
          %p399 = pneg %p164
        $region62: #{tpu_custom_call.1} parent=51 // pred_check_branch
          %401 = sbr.rel (%p399) target = $region64
        $region63: #{tpu_custom_call.1} parent=51 // pred_region
          %402 = dma.done [#allocation6], 512
        $region64: #{tpu_custom_call.1} parent=51 // pred_fallthru
          _
        // Predicated region
        $region65: #{tpu_custom_call.1} parent=51 // pred_check
          %p403 = pneg %p216
        $region66: #{tpu_custom_call.1} parent=51 // pred_check_branch
          %405 = sbr.rel (%p403) target = $region68
        $region67: #{tpu_custom_call.1} parent=51 // pred_region
          %406 = dma.done [#allocation9], 512
        $region68: #{tpu_custom_call.1} parent=51 // pred_fallthru
          _
        %s407 = sand.u32 %s47, 1
        %s408 = scalar_lea.sflag [#allocation3], %s407
        %s409 = sand.u32 %s47, 1
        %s410 = smul.addr %s409, 8
        %s411 = scalar_lea.vmem [#allocation2], %s410
        %p412 = pneg %p60
        %p413 = pneg %p57
        %p414 = scmp.lt.s32.totalorder %s31, 1
        %s415 = scalar_select %p414, %s31, 1
        %s416 = scalar_lea.vmem %s1, %s415
        %p417 = pneg %p86
        %p418 = pneg %p83
        %p419 = pneg %p112
        %p420 = pneg %p109
        %p421 = scmp.lt.s32.totalorder %s32, 0
        %s422 = scalar_select %p421, %s32, 0
        %s423 = scalar_lea.vmem %s3, %s422
        %p424 = pneg %p138
        %p425 = pneg %p135
        %p426 = pneg %p164
        %p427 = pneg %p161
        %p428 = scmp.lt.s32.totalorder %s32, 0
        %s429 = scalar_select %p428, %s32, 0
        %s430 = scalar_lea.vmem %s5, %s429
        %p431 = pneg %p190
        %p432 = pneg %p187
        %p433 = pneg %p216
        %p434 = pneg %p213
        %p435 = scmp.lt.s32.totalorder %s32, 0
        %s436 = scalar_select %p435, %s32, 0
        %s437 = scalar_lea.vmem %s7, %s436
        %p438 = pneg %p242
        %p439 = pneg %p239
        %p440 = pneg %p270
        %p441 = pneg %p267
        %s442 = sand.u32 %s257, 1
        %s443 = scalar_lea.sflag [#allocation4], %s442
        %s444 = sand.u32 %s257, 1
        %s445 = smul.addr %s444, 8
        %s446 = scalar_lea.vmem [#allocation10], %s445
        %p447 = scmp.lt.s32.totalorder %s31, 1
        %s448 = scalar_select %p447, %s31, 1
        %s449 = scalar_lea.vmem %s1, %s448
        %s450 = smul.u32 4, %s32
        %p451 = scmp.lt.s32.totalorder %s32, 0
        %s452 = scalar_select %p451, %s32, 0
        %s453 = scalar_lea.vmem %s3, %s452
        %s454 = smul.u32 4, %s32
        %p455 = scmp.lt.s32.totalorder %s32, 0
        %s456 = scalar_select %p455, %s32, 0
        %s457 = scalar_lea.vmem %s5, %s456
        %s458 = smul.u32 4, %s32
        %p459 = scmp.lt.s32.totalorder %s32, 0
        %s460 = scalar_select %p459, %s32, 0
        %s461 = scalar_lea.vmem %s7, %s460
        %v462 = vld [vmem:[%s390] sm:$0xff]
        %v463 = vld [vmem:[#allocation5] sm:$0xff]
        %v464 = vld [vmem:[#allocation5 + $0x8] sm:$0xff]
        %v465 = vld [vmem:[#allocation5 + $0x10] sm:$0xff]
        %v466 = vld [vmem:[#allocation5 + $0x18] sm:$0xff]
        %v467 = vld [vmem:[%s453] sm:$0x1]
        %v469 = vlaneseq
        %v470 = vshrl.u32 %v469, 7
        %v471 = vsub.s32 0, %v470
        %v472 = vrot.slane %v467, %v471
        %vm474 = vcmask 261120
        %v476 = vsel %vm474, %v462, 0
        %v479 = vsel %vm474, %v463, 0
        %v482 = vsel %vm474, %v464, 0
        %v485 = vsel %vm474, %v465, 0
        %v488 = vsel %vm474, %v466, 0
        %490 = vmatprep.subr.mxu0 0.0
        %491 = vmatpush1.xpose.msra.mxu0 %v479
        %492 = vmatprep.subr.mxu0 0.0
        %493 = vmatpush1.xpose.msra.mxu0 %v482
        %494 = vmatprep.subr.mxu0 0.0
        %495 = vmatpush1.xpose.msra.mxu0 %v485
        %496 = vmatprep.subr.mxu0 0.0
        %497 = vmatpush1.xpose.msra.mxu0 %v488
        %498 = vmatprep.subr.mxu0 0.0
        %499 = vmatpush1.xpose.msra.mxu0 0.0
        %500 = vmatprep.subr.mxu0 0.0
        %501 = vmatpush1.xpose.msra.mxu0 0.0
        %502 = vmatprep.subr.mxu0 0.0
        %503 = vmatpush1.xpose.msra.mxu0 0.0
        %504 = vmatprep.subr.mxu0 0.0
        %505 = vmatpush1.xpose.msra.mxu0 0.0
        %506 = vmatprep.subr.mxu0 0.0
        %507 = vmatpush1.xpose.msra.mxu0 0.0
        %508 = vmatprep.subr.mxu0 0.0
        %509 = vmatpush1.xpose.msra.mxu0 0.0
        %510 = vmatprep.subr.mxu0 0.0
        %511 = vmatpush1.xpose.msra.mxu0 0.0
        %512 = vmatprep.subr.mxu0 0.0
        %513 = vmatpush1.xpose.msra.mxu0 0.0
        %514 = vmatprep.subr.mxu0 0.0
        %515 = vmatpush1.xpose.msra.mxu0 0.0
        %516 = vmatprep.subr.mxu0 0.0
        %517 = vmatpush1.xpose.msra.mxu0 0.0
        %518 = vmatprep.subr.mxu0 0.0
        %519 = vmatpush1.xpose.msra.mxu0 0.0
        %520 = vmatprep.subr.mxu0 0.0
        %521 = vmatpush1.xpose.msra.mxu0 0.0
        %522 = vmatprep.subr.mxu0 0.0
        %523 = vmatpush1.xpose.msra.mxu0 0.0
        %524 = vmatprep.subr.mxu0 0.0
        %525 = vmatpush1.xpose.msra.mxu0 0.0
        %526 = vmatprep.subr.mxu0 0.0
        %527 = vmatpush1.xpose.msra.mxu0 0.0
        %528 = vmatprep.subr.mxu0 0.0
        %529 = vmatpush1.xpose.msra.mxu0 0.0
        %530 = vmatprep.subr.mxu0 0.0
        %531 = vmatpush1.xpose.msra.mxu0 0.0
        %532 = vmatprep.subr.mxu0 0.0
        %533 = vmatpush1.xpose.msra.mxu0 0.0
        %534 = vmatprep.subr.mxu0 0.0
        %535 = vmatpush1.xpose.msra.mxu0 0.0
        %536 = vmatprep.subr.mxu0 0.0
        %537 = vmatpush1.xpose.msra.mxu0 0.0
        %538 = vmatprep.subr.mxu0 0.0
        %539 = vmatpush1.xpose.msra.mxu0 0.0
        %540 = vmatprep.subr.mxu0 0.0
        %541 = vmatpush1.xpose.msra.mxu0 0.0
        %542 = vmatprep.subr.mxu0 0.0
        %543 = vmatpush1.xpose.msra.mxu0 0.0
        %544 = vmatprep.subr.mxu0 0.0
        %545 = vmatpush1.xpose.msra.mxu0 0.0
        %546 = vmatprep.subr.mxu0 0.0
        %547 = vmatpush1.xpose.msra.mxu0 0.0
        %548 = vmatprep.subr.mxu0 0.0
        %549 = vmatpush1.xpose.msra.mxu0 0.0
        %550 = vmatprep.subr.mxu0 0.0
        %551 = vmatpush1.xpose.msra.mxu0 0.0
        %552 = vmatprep.subr.mxu0 0.0
        %553 = vmatpush1.xpose.msra.mxu0 0.0
        %554 = vmatprep.mubr.f32.mxu0 0.0
        %555 = vmatmul.mubr.f32.gmra.mrb[0].mxu0 %v476
        %v556 = vpop.f32.mrb[0].mxu0
        %v557 = vadd.f32 %v472, %v556
        %v558 = vpop.f32.mrb[0].mxu0
        %559 = vdwg.mxu0
        %v560 = vmul.f32 %v557, 0.35355338
        %v561 = vld [vmem:[#allocation7] sm:$0xff]
        %v562 = vld [vmem:[#allocation7 + $0x8] sm:$0xff]
        %v563 = vld [vmem:[#allocation7 + $0x10] sm:$0xff]
        %v564 = vld [vmem:[#allocation7 + $0x18] sm:$0xff]
        %v565 = vld [vmem:[%s457] sm:$0x1]
        %v567 = vlaneseq
        %v568 = vshrl.u32 %v567, 7
        %v569 = vsub.s32 0, %v568
        %v570 = vrot.slane %v565, %v569
        %v573 = vsel %vm474, %v561, 0
        %v576 = vsel %vm474, %v562, 0
        %v579 = vsel %vm474, %v563, 0
        %v582 = vsel %vm474, %v564, 0
        %584 = vmatprep.subr.mxu0 0.0
        %585 = vmatpush1.xpose.msra.mxu0 %v573
        %586 = vmatprep.subr.mxu0 0.0
        %587 = vmatpush1.xpose.msra.mxu0 %v576
        %588 = vmatprep.subr.mxu0 0.0
        %589 = vmatpush1.xpose.msra.mxu0 %v579
        %590 = vmatprep.subr.mxu0 0.0
        %591 = vmatpush1.xpose.msra.mxu0 %v582
        %592 = vmatprep.subr.mxu0 0.0
        %593 = vmatpush1.xpose.msra.mxu0 0.0
        %594 = vmatprep.subr.mxu0 0.0
        %595 = vmatpush1.xpose.msra.mxu0 0.0
        %596 = vmatprep.subr.mxu0 0.0
        %597 = vmatpush1.xpose.msra.mxu0 0.0
        %598 = vmatprep.subr.mxu0 0.0
        %599 = vmatpush1.xpose.msra.mxu0 0.0
        %600 = vmatprep.subr.mxu0 0.0
        %601 = vmatpush1.xpose.msra.mxu0 0.0
        %602 = vmatprep.subr.mxu0 0.0
        %603 = vmatpush1.xpose.msra.mxu0 0.0
        %604 = vmatprep.subr.mxu0 0.0
        %605 = vmatpush1.xpose.msra.mxu0 0.0
        %606 = vmatprep.subr.mxu0 0.0
        %607 = vmatpush1.xpose.msra.mxu0 0.0
        %608 = vmatprep.subr.mxu0 0.0
        %609 = vmatpush1.xpose.msra.mxu0 0.0
        %610 = vmatprep.subr.mxu0 0.0
        %611 = vmatpush1.xpose.msra.mxu0 0.0
        %612 = vmatprep.subr.mxu0 0.0
        %613 = vmatpush1.xpose.msra.mxu0 0.0
        %614 = vmatprep.subr.mxu0 0.0
        %615 = vmatpush1.xpose.msra.mxu0 0.0
        %616 = vmatprep.subr.mxu0 0.0
        %617 = vmatpush1.xpose.msra.mxu0 0.0
        %618 = vmatprep.subr.mxu0 0.0
        %619 = vmatpush1.xpose.msra.mxu0 0.0
        %620 = vmatprep.subr.mxu0 0.0
        %621 = vmatpush1.xpose.msra.mxu0 0.0
        %622 = vmatprep.subr.mxu0 0.0
        %623 = vmatpush1.xpose.msra.mxu0 0.0
        %624 = vmatprep.subr.mxu0 0.0
        %625 = vmatpush1.xpose.msra.mxu0 0.0
        %626 = vmatprep.subr.mxu0 0.0
        %627 = vmatpush1.xpose.msra.mxu0 0.0
        %628 = vmatprep.subr.mxu0 0.0
        %629 = vmatpush1.xpose.msra.mxu0 0.0
        %630 = vmatprep.subr.mxu0 0.0
        %631 = vmatpush1.xpose.msra.mxu0 0.0
        %632 = vmatprep.subr.mxu0 0.0
        %633 = vmatpush1.xpose.msra.mxu0 0.0
        %634 = vmatprep.subr.mxu0 0.0
        %635 = vmatpush1.xpose.msra.mxu0 0.0
        %636 = vmatprep.subr.mxu0 0.0
        %637 = vmatpush1.xpose.msra.mxu0 0.0
        %638 = vmatprep.subr.mxu0 0.0
        %639 = vmatpush1.xpose.msra.mxu0 0.0
        %640 = vmatprep.subr.mxu0 0.0
        %641 = vmatpush1.xpose.msra.mxu0 0.0
        %642 = vmatprep.subr.mxu0 0.0
        %643 = vmatpush1.xpose.msra.mxu0 0.0
        %644 = vmatprep.subr.mxu0 0.0
        %645 = vmatpush1.xpose.msra.mxu0 0.0
        %646 = vmatprep.subr.mxu0 0.0
        %647 = vmatpush1.xpose.msra.mxu0 0.0
        %648 = vmatprep.mubr.f32.mxu0 0.0
        %649 = vmatmul.mubr.f32.gmra.mrb[0].mxu0 %v476
        %v650 = vpop.f32.mrb[0].mxu0
        %v651 = vadd.f32 %v570, %v650
        %v652 = vpop.f32.mrb[0].mxu0
        %653 = vdwg.mxu0
        %v654 = vld [vmem:[#allocation8] sm:$0xff]
        %v655 = vld [vmem:[#allocation8 + $0x8] sm:$0xff]
        %v656 = vld [vmem:[#allocation8 + $0x10] sm:$0xff]
        %v657 = vld [vmem:[#allocation8 + $0x18] sm:$0xff]
        %v658 = vld [vmem:[%s461] sm:$0x1]
        %v660 = vlaneseq
        %v661 = vshrl.u32 %v660, 7
        %v662 = vsub.s32 0, %v661
        %v663 = vrot.slane %v658, %v662
        %v666 = vsel %vm474, %v654, 0
        %v669 = vsel %vm474, %v655, 0
        %v672 = vsel %vm474, %v656, 0
        %v675 = vsel %vm474, %v657, 0
        %677 = vmatprep.subr.mxu0 0.0
        %678 = vmatpush1.xpose.msra.mxu0 %v666
        %679 = vmatprep.subr.mxu0 0.0
        %680 = vmatpush1.xpose.msra.mxu0 %v669
        %681 = vmatprep.subr.mxu0 0.0
        %682 = vmatpush1.xpose.msra.mxu0 %v672
        %683 = vmatprep.subr.mxu0 0.0
        %684 = vmatpush1.xpose.msra.mxu0 %v675
        %685 = vmatprep.subr.mxu0 0.0
        %686 = vmatpush1.xpose.msra.mxu0 0.0
        %687 = vmatprep.subr.mxu0 0.0
        %688 = vmatpush1.xpose.msra.mxu0 0.0
        %689 = vmatprep.subr.mxu0 0.0
        %690 = vmatpush1.xpose.msra.mxu0 0.0
        %691 = vmatprep.subr.mxu0 0.0
        %692 = vmatpush1.xpose.msra.mxu0 0.0
        %693 = vmatprep.subr.mxu0 0.0
        %694 = vmatpush1.xpose.msra.mxu0 0.0
        %695 = vmatprep.subr.mxu0 0.0
        %696 = vmatpush1.xpose.msra.mxu0 0.0
        %697 = vmatprep.subr.mxu0 0.0
        %698 = vmatpush1.xpose.msra.mxu0 0.0
        %699 = vmatprep.subr.mxu0 0.0
        %700 = vmatpush1.xpose.msra.mxu0 0.0
        %701 = vmatprep.subr.mxu0 0.0
        %702 = vmatpush1.xpose.msra.mxu0 0.0
        %703 = vmatprep.subr.mxu0 0.0
        %704 = vmatpush1.xpose.msra.mxu0 0.0
        %705 = vmatprep.subr.mxu0 0.0
        %706 = vmatpush1.xpose.msra.mxu0 0.0
        %707 = vmatprep.subr.mxu0 0.0
        %708 = vmatpush1.xpose.msra.mxu0 0.0
        %709 = vmatprep.subr.mxu0 0.0
        %710 = vmatpush1.xpose.msra.mxu0 0.0
        %711 = vmatprep.subr.mxu0 0.0
        %712 = vmatpush1.xpose.msra.mxu0 0.0
        %713 = vmatprep.subr.mxu0 0.0
        %714 = vmatpush1.xpose.msra.mxu0 0.0
        %715 = vmatprep.subr.mxu0 0.0
        %716 = vmatpush1.xpose.msra.mxu0 0.0
        %717 = vmatprep.subr.mxu0 0.0
        %718 = vmatpush1.xpose.msra.mxu0 0.0
        %719 = vmatprep.subr.mxu0 0.0
        %720 = vmatpush1.xpose.msra.mxu0 0.0
        %721 = vmatprep.subr.mxu0 0.0
        %722 = vmatpush1.xpose.msra.mxu0 0.0
        %723 = vmatprep.subr.mxu0 0.0
        %724 = vmatpush1.xpose.msra.mxu0 0.0
        %725 = vmatprep.subr.mxu0 0.0
        %726 = vmatpush1.xpose.msra.mxu0 0.0
        %727 = vmatprep.subr.mxu0 0.0
        %728 = vmatpush1.xpose.msra.mxu0 0.0
        %729 = vmatprep.subr.mxu0 0.0
        %730 = vmatpush1.xpose.msra.mxu0 0.0
        %731 = vmatprep.subr.mxu0 0.0
        %732 = vmatpush1.xpose.msra.mxu0 0.0
        %733 = vmatprep.subr.mxu0 0.0
        %734 = vmatpush1.xpose.msra.mxu0 0.0
        %735 = vmatprep.subr.mxu0 0.0
        %736 = vmatpush1.xpose.msra.mxu0 0.0
        %737 = vmatprep.subr.mxu0 0.0
        %738 = vmatpush1.xpose.msra.mxu0 0.0
        %739 = vmatprep.subr.mxu0 0.0
        %740 = vmatpush1.xpose.msra.mxu0 0.0
        %741 = vmatprep.mubr.f32.mxu0 0.0
        %742 = vmatmul.mubr.f32.gmra.mrb[0].mxu0 %v476
        %v743 = vpop.f32.mrb[0].mxu0
        %v744 = vadd.f32 %v663, %v743
        %v745 = vpop.f32.mrb[0].mxu0
        %746 = vdwg.mxu0
        %v747 = vld [vmem:[%s449] sm:$0x1]
        %v749 = vlaneseq
        %v750 = vshrl.u32 %v749, 7
        %v751 = vsub.s32 0, %v750
        %v752 = vrot.slane %v747, %v751
        %vm754 = vcmask 64512
        %v756 = vsel %vm754, %v560, 0
        %v759 = vsel %vm754, %v651, 0
        %761 = vmatprep.subr.mxu0 0.0
        %762 = vmatpush1.xpose.msra.mxu0 %v759
        %763 = vmatprep.subr.mxu0 0.0
        %764 = vmatpush1.xpose.msra.mxu0 0.0
        %765 = vmatprep.subr.mxu0 0.0
        %766 = vmatpush1.xpose.msra.mxu0 0.0
        %767 = vmatprep.subr.mxu0 0.0
        %768 = vmatpush1.xpose.msra.mxu0 0.0
        %769 = vmatprep.subr.mxu0 0.0
        %770 = vmatpush1.xpose.msra.mxu0 0.0
        %771 = vmatprep.subr.mxu0 0.0
        %772 = vmatpush1.xpose.msra.mxu0 0.0
        %773 = vmatprep.subr.mxu0 0.0
        %774 = vmatpush1.xpose.msra.mxu0 0.0
        %775 = vmatprep.subr.mxu0 0.0
        %776 = vmatpush1.xpose.msra.mxu0 0.0
        %777 = vmatprep.subr.mxu0 0.0
        %778 = vmatpush1.xpose.msra.mxu0 0.0
        %779 = vmatprep.subr.mxu0 0.0
        %780 = vmatpush1.xpose.msra.mxu0 0.0
        %781 = vmatprep.subr.mxu0 0.0
        %782 = vmatpush1.xpose.msra.mxu0 0.0
        %783 = vmatprep.subr.mxu0 0.0
        %784 = vmatpush1.xpose.msra.mxu0 0.0
        %785 = vmatprep.subr.mxu0 0.0
        %786 = vmatpush1.xpose.msra.mxu0 0.0
        %787 = vmatprep.subr.mxu0 0.0
        %788 = vmatpush1.xpose.msra.mxu0 0.0
        %789 = vmatprep.subr.mxu0 0.0
        %790 = vmatpush1.xpose.msra.mxu0 0.0
        %791 = vmatprep.subr.mxu0 0.0
        %792 = vmatpush1.xpose.msra.mxu0 0.0
        %793 = vmatprep.subr.mxu0 0.0
        %794 = vmatpush1.xpose.msra.mxu0 0.0
        %795 = vmatprep.subr.mxu0 0.0
        %796 = vmatpush1.xpose.msra.mxu0 0.0
        %797 = vmatprep.subr.mxu0 0.0
        %798 = vmatpush1.xpose.msra.mxu0 0.0
        %799 = vmatprep.subr.mxu0 0.0
        %800 = vmatpush1.xpose.msra.mxu0 0.0
        %801 = vmatprep.subr.mxu0 0.0
        %802 = vmatpush1.xpose.msra.mxu0 0.0
        %803 = vmatprep.subr.mxu0 0.0
        %804 = vmatpush1.xpose.msra.mxu0 0.0
        %805 = vmatprep.subr.mxu0 0.0
        %806 = vmatpush1.xpose.msra.mxu0 0.0
        %807 = vmatprep.subr.mxu0 0.0
        %808 = vmatpush1.xpose.msra.mxu0 0.0
        %809 = vmatprep.subr.mxu0 0.0
        %810 = vmatpush1.xpose.msra.mxu0 0.0
        %811 = vmatprep.subr.mxu0 0.0
        %812 = vmatpush1.xpose.msra.mxu0 0.0
        %813 = vmatprep.subr.mxu0 0.0
        %814 = vmatpush1.xpose.msra.mxu0 0.0
        %815 = vmatprep.subr.mxu0 0.0
        %816 = vmatpush1.xpose.msra.mxu0 0.0
        %817 = vmatprep.subr.mxu0 0.0
        %818 = vmatpush1.xpose.msra.mxu0 0.0
        %819 = vmatprep.subr.mxu0 0.0
        %820 = vmatpush1.xpose.msra.mxu0 0.0
        %821 = vmatprep.subr.mxu0 0.0
        %822 = vmatpush1.xpose.msra.mxu0 0.0
        %823 = vmatprep.subr.mxu0 0.0
        %824 = vmatpush1.xpose.msra.mxu0 0.0
        %825 = vmatprep.mubr.f32.mxu0 0.0
        %826 = vmatmul.mubr.f32.gmra.mrb[0].mxu0 %v756
        %v827 = vpop.f32.mrb[0].mxu0
        %v828 = vadd.f32 %v752, %v827
        %v829 = vpop.f32.mrb[0].mxu0
        %830 = vdwg.mxu0
        %v831 = vsel %vm754, %v828, -inf
        %832 = vmax.xlane.f32.xlu0 %v831
        %v833 = vpop.xlane.xlu0 %832
        %v834 = vsub.f32 %v828, %v833
        %v835 = vmul.f32 %v834, 1.442695
        %v836 = vpow.pop %v835
        %v837 = vsel %vm754, %v836, 0.0
        %838 = vadd.xlane.f32.xlu0 %v837
        %v839 = vpop.xlane.xlu0 %838
        %v841 = vsel %vm754, %v836, 0
        %843 = vmatprep.subr.mxu0 0.0
        %844 = vmatpush1.msra.mxu0 %v744
        %845 = vmatprep.subr.mxu0 0.0
        %846 = vmatpush1.msra.mxu0 0.0
        %847 = vmatprep.subr.mxu0 0.0
        %848 = vmatpush1.msra.mxu0 0.0
        %849 = vmatprep.subr.mxu0 0.0
        %850 = vmatpush1.msra.mxu0 0.0
        %851 = vmatprep.subr.mxu0 0.0
        %852 = vmatpush1.msra.mxu0 0.0
        %853 = vmatprep.subr.mxu0 0.0
        %854 = vmatpush1.msra.mxu0 0.0
        %855 = vmatprep.subr.mxu0 0.0
        %856 = vmatpush1.msra.mxu0 0.0
        %857 = vmatprep.subr.mxu0 0.0
        %858 = vmatpush1.msra.mxu0 0.0
        %859 = vmatprep.subr.mxu0 0.0
        %860 = vmatpush1.msra.mxu0 0.0
        %861 = vmatprep.subr.mxu0 0.0
        %862 = vmatpush1.msra.mxu0 0.0
        %863 = vmatprep.subr.mxu0 0.0
        %864 = vmatpush1.msra.mxu0 0.0
        %865 = vmatprep.subr.mxu0 0.0
        %866 = vmatpush1.msra.mxu0 0.0
        %867 = vmatprep.subr.mxu0 0.0
        %868 = vmatpush1.msra.mxu0 0.0
        %869 = vmatprep.subr.mxu0 0.0
        %870 = vmatpush1.msra.mxu0 0.0
        %871 = vmatprep.subr.mxu0 0.0
        %872 = vmatpush1.msra.mxu0 0.0
        %873 = vmatprep.subr.mxu0 0.0
        %874 = vmatpush1.msra.mxu0 0.0
        %875 = vmatprep.subr.mxu0 0.0
        %876 = vmatpush1.msra.mxu0 0.0
        %877 = vmatprep.subr.mxu0 0.0
        %878 = vmatpush1.msra.mxu0 0.0
        %879 = vmatprep.subr.mxu0 0.0
        %880 = vmatpush1.msra.mxu0 0.0
        %881 = vmatprep.subr.mxu0 0.0
        %882 = vmatpush1.msra.mxu0 0.0
        %883 = vmatprep.subr.mxu0 0.0
        %884 = vmatpush1.msra.mxu0 0.0
        %885 = vmatprep.subr.mxu0 0.0
        %886 = vmatpush1.msra.mxu0 0.0
        %887 = vmatprep.subr.mxu0 0.0
        %888 = vmatpush1.msra.mxu0 0.0
        %889 = vmatprep.subr.mxu0 0.0
        %890 = vmatpush1.msra.mxu0 0.0
        %891 = vmatprep.subr.mxu0 0.0
        %892 = vmatpush1.msra.mxu0 0.0
        %893 = vmatprep.subr.mxu0 0.0
        %894 = vmatpush1.msra.mxu0 0.0
        %895 = vmatprep.subr.mxu0 0.0
        %896 = vmatpush1.msra.mxu0 0.0
        %897 = vmatprep.subr.mxu0 0.0
        %898 = vmatpush1.msra.mxu0 0.0
        %899 = vmatprep.subr.mxu0 0.0
        %900 = vmatpush1.msra.mxu0 0.0
        %901 = vmatprep.subr.mxu0 0.0
        %902 = vmatpush1.msra.mxu0 0.0
        %903 = vmatprep.subr.mxu0 0.0
        %904 = vmatpush1.msra.mxu0 0.0
        %905 = vmatprep.subr.mxu0 0.0
        %906 = vmatpush1.msra.mxu0 0.0
        %907 = vmatprep.mubr.f32.mxu0 0.0
        %908 = vmatmul.mubr.f32.gmra.mrb[0].mxu0 %v841
        %v909 = vpop.f32.mrb[0].mxu0
        %v910 = vadd.f32 0.0, %v909
        %v911 = vpop.f32.mrb[0].mxu0
        %912 = vdwg.mxu0
        %v913 = vrcp.pop %v839
        %v914 = vmul.f32 %v910, %v913
        %915 = vrot.lane.b32.xlu0 %v560, 120
        %v916 = vpop.permute.xlu0 %915
        %917 = vrot.lane.b32.xlu0 %v651, 120
        %v918 = vpop.permute.xlu0 %917
        %v919 = vsel %vm754, %v916, 0
        %v921 = vsel %vm754, %v918, 0
        %923 = vmatprep.subr.mxu0 0.0
        %924 = vmatpush1.xpose.msra.mxu0 %v921
        %925 = vmatprep.subr.mxu0 0.0
        %926 = vmatpush1.xpose.msra.mxu0 0.0
        %927 = vmatprep.subr.mxu0 0.0
        %928 = vmatpush1.xpose.msra.mxu0 0.0
        %929 = vmatprep.subr.mxu0 0.0
        %930 = vmatpush1.xpose.msra.mxu0 0.0
        %931 = vmatprep.subr.mxu0 0.0
        %932 = vmatpush1.xpose.msra.mxu0 0.0
        %933 = vmatprep.subr.mxu0 0.0
        %934 = vmatpush1.xpose.msra.mxu0 0.0
        %935 = vmatprep.subr.mxu0 0.0
        %936 = vmatpush1.xpose.msra.mxu0 0.0
        %937 = vmatprep.subr.mxu0 0.0
        %938 = vmatpush1.xpose.msra.mxu0 0.0
        %939 = vmatprep.subr.mxu0 0.0
        %940 = vmatpush1.xpose.msra.mxu0 0.0
        %941 = vmatprep.subr.mxu0 0.0
        %942 = vmatpush1.xpose.msra.mxu0 0.0
        %943 = vmatprep.subr.mxu0 0.0
        %944 = vmatpush1.xpose.msra.mxu0 0.0
        %945 = vmatprep.subr.mxu0 0.0
        %946 = vmatpush1.xpose.msra.mxu0 0.0
        %947 = vmatprep.subr.mxu0 0.0
        %948 = vmatpush1.xpose.msra.mxu0 0.0
        %949 = vmatprep.subr.mxu0 0.0
        %950 = vmatpush1.xpose.msra.mxu0 0.0
        %951 = vmatprep.subr.mxu0 0.0
        %952 = vmatpush1.xpose.msra.mxu0 0.0
        %953 = vmatprep.subr.mxu0 0.0
        %954 = vmatpush1.xpose.msra.mxu0 0.0
        %955 = vmatprep.subr.mxu0 0.0
        %956 = vmatpush1.xpose.msra.mxu0 0.0
        %957 = vmatprep.subr.mxu0 0.0
        %958 = vmatpush1.xpose.msra.mxu0 0.0
        %959 = vmatprep.subr.mxu0 0.0
        %960 = vmatpush1.xpose.msra.mxu0 0.0
        %961 = vmatprep.subr.mxu0 0.0
        %962 = vmatpush1.xpose.msra.mxu0 0.0
        %963 = vmatprep.subr.mxu0 0.0
        %964 = vmatpush1.xpose.msra.mxu0 0.0
        %965 = vmatprep.subr.mxu0 0.0
        %966 = vmatpush1.xpose.msra.mxu0 0.0
        %967 = vmatprep.subr.mxu0 0.0
        %968 = vmatpush1.xpose.msra.mxu0 0.0
        %969 = vmatprep.subr.mxu0 0.0
        %970 = vmatpush1.xpose.msra.mxu0 0.0
        %971 = vmatprep.subr.mxu0 0.0
        %972 = vmatpush1.xpose.msra.mxu0 0.0
        %973 = vmatprep.subr.mxu0 0.0
        %974 = vmatpush1.xpose.msra.mxu0 0.0
        %975 = vmatprep.subr.mxu0 0.0
        %976 = vmatpush1.xpose.msra.mxu0 0.0
        %977 = vmatprep.subr.mxu0 0.0
        %978 = vmatpush1.xpose.msra.mxu0 0.0
        %979 = vmatprep.subr.mxu0 0.0
        %980 = vmatpush1.xpose.msra.mxu0 0.0
        %981 = vmatprep.subr.mxu0 0.0
        %982 = vmatpush1.xpose.msra.mxu0 0.0
        %983 = vmatprep.subr.mxu0 0.0
        %984 = vmatpush1.xpose.msra.mxu0 0.0
        %985 = vmatprep.subr.mxu0 0.0
        %986 = vmatpush1.xpose.msra.mxu0 0.0
        %987 = vmatprep.mubr.f32.mxu0 0.0
        %988 = vmatmul.mubr.f32.gmra.mrb[0].mxu0 %v919
        %v989 = vpop.f32.mrb[0].mxu0
        %v990 = vadd.f32 %v752, %v989
        %v991 = vpop.f32.mrb[0].mxu0
        %992 = vdwg.mxu0
        %v993 = vsel %vm754, %v990, -inf
        %994 = vmax.xlane.f32.xlu0 %v993
        %v995 = vpop.xlane.xlu0 %994
        %v996 = vsub.f32 %v990, %v995
        %v997 = vmul.f32 %v996, 1.442695
        %v998 = vpow.pop %v997
        %v999 = vsel %vm754, %v998, 0.0
        %1000 = vadd.xlane.f32.xlu0 %v999
        %v1001 = vpop.xlane.xlu0 %1000
        %1003 = vrot.lane.b32.xlu0 %v744, 120
        %v1004 = vpop.permute.xlu0 %1003
        %v1007 = vsel %vm754, %v998, 0
        %1009 = vmatprep.subr.mxu0 0.0
        %1010 = vmatpush1.msra.mxu0 %v1004
        %1011 = vmatprep.subr.mxu0 0.0
        %1012 = vmatpush1.msra.mxu0 0.0
        %1013 = vmatprep.subr.mxu0 0.0
        %1014 = vmatpush1.msra.mxu0 0.0
        %1015 = vmatprep.subr.mxu0 0.0
        %1016 = vmatpush1.msra.mxu0 0.0
        %1017 = vmatprep.subr.mxu0 0.0
        %1018 = vmatpush1.msra.mxu0 0.0
        %1019 = vmatprep.subr.mxu0 0.0
        %1020 = vmatpush1.msra.mxu0 0.0
        %1021 = vmatprep.subr.mxu0 0.0
        %1022 = vmatpush1.msra.mxu0 0.0
        %1023 = vmatprep.subr.mxu0 0.0
        %1024 = vmatpush1.msra.mxu0 0.0
        %1025 = vmatprep.subr.mxu0 0.0
        %1026 = vmatpush1.msra.mxu0 0.0
        %1027 = vmatprep.subr.mxu0 0.0
        %1028 = vmatpush1.msra.mxu0 0.0
        %1029 = vmatprep.subr.mxu0 0.0
        %1030 = vmatpush1.msra.mxu0 0.0
        %1031 = vmatprep.subr.mxu0 0.0
        %1032 = vmatpush1.msra.mxu0 0.0
        %1033 = vmatprep.subr.mxu0 0.0
        %1034 = vmatpush1.msra.mxu0 0.0
        %1035 = vmatprep.subr.mxu0 0.0
        %1036 = vmatpush1.msra.mxu0 0.0
        %1037 = vmatprep.subr.mxu0 0.0
        %1038 = vmatpush1.msra.mxu0 0.0
        %1039 = vmatprep.subr.mxu0 0.0
        %1040 = vmatpush1.msra.mxu0 0.0
        %1041 = vmatprep.subr.mxu0 0.0
        %1042 = vmatpush1.msra.mxu0 0.0
        %1043 = vmatprep.subr.mxu0 0.0
        %1044 = vmatpush1.msra.mxu0 0.0
        %1045 = vmatprep.subr.mxu0 0.0
        %1046 = vmatpush1.msra.mxu0 0.0
        %1047 = vmatprep.subr.mxu0 0.0
        %1048 = vmatpush1.msra.mxu0 0.0
        %1049 = vmatprep.subr.mxu0 0.0
        %1050 = vmatpush1.msra.mxu0 0.0
        %1051 = vmatprep.subr.mxu0 0.0
        %1052 = vmatpush1.msra.mxu0 0.0
        %1053 = vmatprep.subr.mxu0 0.0
        %1054 = vmatpush1.msra.mxu0 0.0
        %1055 = vmatprep.subr.mxu0 0.0
        %1056 = vmatpush1.msra.mxu0 0.0
        %1057 = vmatprep.subr.mxu0 0.0
        %1058 = vmatpush1.msra.mxu0 0.0
        %1059 = vmatprep.subr.mxu0 0.0
        %1060 = vmatpush1.msra.mxu0 0.0
        %1061 = vmatprep.subr.mxu0 0.0
        %1062 = vmatpush1.msra.mxu0 0.0
        %1063 = vmatprep.subr.mxu0 0.0
        %1064 = vmatpush1.msra.mxu0 0.0
        %1065 = vmatprep.subr.mxu0 0.0
        %1066 = vmatpush1.msra.mxu0 0.0
        %1067 = vmatprep.subr.mxu0 0.0
        %1068 = vmatpush1.msra.mxu0 0.0
        %1069 = vmatprep.subr.mxu0 0.0
        %1070 = vmatpush1.msra.mxu0 0.0
        %1071 = vmatprep.subr.mxu0 0.0
        %1072 = vmatpush1.msra.mxu0 0.0
        %1073 = vmatprep.mubr.f32.mxu0 0.0
        %1074 = vmatmul.mubr.f32.gmra.mrb[0].mxu0 %v1007
        %v1075 = vpop.f32.mrb[0].mxu0
        %v1076 = vadd.f32 0.0, %v1075
        %v1077 = vpop.f32.mrb[0].mxu0
        %1078 = vdwg.mxu0
        %v1079 = vrcp.pop %v1001
        %v1080 = vmul.f32 %v1076, %v1079
        %1081 = vrot.lane.b32.xlu0 %v560, 112
        %v1082 = vpop.permute.xlu0 %1081
        %1083 = vrot.lane.b32.xlu0 %v651, 112
        %v1084 = vpop.permute.xlu0 %1083
        %v1085 = vsel %vm754, %v1082, 0
        %v1087 = vsel %vm754, %v1084, 0
        %1089 = vmatprep.subr.mxu0 0.0
        %1090 = vmatpush1.xpose.msra.mxu0 %v1087
        %1091 = vmatprep.subr.mxu0 0.0
        %1092 = vmatpush1.xpose.msra.mxu0 0.0
        %1093 = vmatprep.subr.mxu0 0.0
        %1094 = vmatpush1.xpose.msra.mxu0 0.0
        %1095 = vmatprep.subr.mxu0 0.0
        %1096 = vmatpush1.xpose.msra.mxu0 0.0
        %1097 = vmatprep.subr.mxu0 0.0
        %1098 = vmatpush1.xpose.msra.mxu0 0.0
        %1099 = vmatprep.subr.mxu0 0.0
        %1100 = vmatpush1.xpose.msra.mxu0 0.0
        %1101 = vmatprep.subr.mxu0 0.0
        %1102 = vmatpush1.xpose.msra.mxu0 0.0
        %1103 = vmatprep.subr.mxu0 0.0
        %1104 = vmatpush1.xpose.msra.mxu0 0.0
        %1105 = vmatprep.subr.mxu0 0.0
        %1106 = vmatpush1.xpose.msra.mxu0 0.0
        %1107 = vmatprep.subr.mxu0 0.0
        %1108 = vmatpush1.xpose.msra.mxu0 0.0
        %1109 = vmatprep.subr.mxu0 0.0
        %1110 = vmatpush1.xpose.msra.mxu0 0.0
        %1111 = vmatprep.subr.mxu0 0.0
        %1112 = vmatpush1.xpose.msra.mxu0 0.0
        %1113 = vmatprep.subr.mxu0 0.0
        %1114 = vmatpush1.xpose.msra.mxu0 0.0
        %1115 = vmatprep.subr.mxu0 0.0
        %1116 = vmatpush1.xpose.msra.mxu0 0.0
        %1117 = vmatprep.subr.mxu0 0.0
        %1118 = vmatpush1.xpose.msra.mxu0 0.0
        %1119 = vmatprep.subr.mxu0 0.0
        %1120 = vmatpush1.xpose.msra.mxu0 0.0
        %1121 = vmatprep.subr.mxu0 0.0
        %1122 = vmatpush1.xpose.msra.mxu0 0.0
        %1123 = vmatprep.subr.mxu0 0.0
        %1124 = vmatpush1.xpose.msra.mxu0 0.0
        %1125 = vmatprep.subr.mxu0 0.0
        %1126 = vmatpush1.xpose.msra.mxu0 0.0
        %1127 = vmatprep.subr.mxu0 0.0
        %1128 = vmatpush1.xpose.msra.mxu0 0.0
        %1129 = vmatprep.subr.mxu0 0.0
        %1130 = vmatpush1.xpose.msra.mxu0 0.0
        %1131 = vmatprep.subr.mxu0 0.0
        %1132 = vmatpush1.xpose.msra.mxu0 0.0
        %1133 = vmatprep.subr.mxu0 0.0
        %1134 = vmatpush1.xpose.msra.mxu0 0.0
        %1135 = vmatprep.subr.mxu0 0.0
        %1136 = vmatpush1.xpose.msra.mxu0 0.0
        %1137 = vmatprep.subr.mxu0 0.0
        %1138 = vmatpush1.xpose.msra.mxu0 0.0
        %1139 = vmatprep.subr.mxu0 0.0
        %1140 = vmatpush1.xpose.msra.mxu0 0.0
        %1141 = vmatprep.subr.mxu0 0.0
        %1142 = vmatpush1.xpose.msra.mxu0 0.0
        %1143 = vmatprep.subr.mxu0 0.0
        %1144 = vmatpush1.xpose.msra.mxu0 0.0
        %1145 = vmatprep.subr.mxu0 0.0
        %1146 = vmatpush1.xpose.msra.mxu0 0.0
        %1147 = vmatprep.subr.mxu0 0.0
        %1148 = vmatpush1.xpose.msra.mxu0 0.0
        %1149 = vmatprep.subr.mxu0 0.0
        %1150 = vmatpush1.xpose.msra.mxu0 0.0
        %1151 = vmatprep.subr.mxu0 0.0
        %1152 = vmatpush1.xpose.msra.mxu0 0.0
        %1153 = vmatprep.mubr.f32.mxu0 0.0
        %1154 = vmatmul.mubr.f32.gmra.mrb[0].mxu0 %v1085
        %v1155 = vpop.f32.mrb[0].mxu0
        %v1156 = vadd.f32 %v752, %v1155
        %v1157 = vpop.f32.mrb[0].mxu0
        %1158 = vdwg.mxu0
        %v1159 = vsel %vm754, %v1156, -inf
        %1160 = vmax.xlane.f32.xlu0 %v1159
        %v1161 = vpop.xlane.xlu0 %1160
        %v1162 = vsub.f32 %v1156, %v1161
        %v1163 = vmul.f32 %v1162, 1.442695
        %v1164 = vpow.pop %v1163
        %v1165 = vsel %vm754, %v1164, 0.0
        %1166 = vadd.xlane.f32.xlu0 %v1165
        %v1167 = vpop.xlane.xlu0 %1166
        %1168 = vrot.lane.b32.xlu0 %v744, 112
        %v1169 = vpop.permute.xlu0 %1168
        %v1172 = vsel %vm754, %v1164, 0
        %1174 = vmatprep.subr.mxu0 0.0
        %1175 = vmatpush1.msra.mxu0 %v1169
        %1176 = vmatprep.subr.mxu0 0.0
        %1177 = vmatpush1.msra.mxu0 0.0
        %1178 = vmatprep.subr.mxu0 0.0
        %1179 = vmatpush1.msra.mxu0 0.0
        %1180 = vmatprep.subr.mxu0 0.0
        %1181 = vmatpush1.msra.mxu0 0.0
        %1182 = vmatprep.subr.mxu0 0.0
        %1183 = vmatpush1.msra.mxu0 0.0
        %1184 = vmatprep.subr.mxu0 0.0
        %1185 = vmatpush1.msra.mxu0 0.0
        %1186 = vmatprep.subr.mxu0 0.0
        %1187 = vmatpush1.msra.mxu0 0.0
        %1188 = vmatprep.subr.mxu0 0.0
        %1189 = vmatpush1.msra.mxu0 0.0
        %1190 = vmatprep.subr.mxu0 0.0
        %1191 = vmatpush1.msra.mxu0 0.0
        %1192 = vmatprep.subr.mxu0 0.0
        %1193 = vmatpush1.msra.mxu0 0.0
        %1194 = vmatprep.subr.mxu0 0.0
        %1195 = vmatpush1.msra.mxu0 0.0
        %1196 = vmatprep.subr.mxu0 0.0
        %1197 = vmatpush1.msra.mxu0 0.0
        %1198 = vmatprep.subr.mxu0 0.0
        %1199 = vmatpush1.msra.mxu0 0.0
        %1200 = vmatprep.subr.mxu0 0.0
        %1201 = vmatpush1.msra.mxu0 0.0
        %1202 = vmatprep.subr.mxu0 0.0
        %1203 = vmatpush1.msra.mxu0 0.0
        %1204 = vmatprep.subr.mxu0 0.0
        %1205 = vmatpush1.msra.mxu0 0.0
        %1206 = vmatprep.subr.mxu0 0.0
        %1207 = vmatpush1.msra.mxu0 0.0
        %1208 = vmatprep.subr.mxu0 0.0
        %1209 = vmatpush1.msra.mxu0 0.0
        %1210 = vmatprep.subr.mxu0 0.0
        %1211 = vmatpush1.msra.mxu0 0.0
        %1212 = vmatprep.subr.mxu0 0.0
        %1213 = vmatpush1.msra.mxu0 0.0
        %1214 = vmatprep.subr.mxu0 0.0
        %1215 = vmatpush1.msra.mxu0 0.0
        %1216 = vmatprep.subr.mxu0 0.0
        %1217 = vmatpush1.msra.mxu0 0.0
        %1218 = vmatprep.subr.mxu0 0.0
        %1219 = vmatpush1.msra.mxu0 0.0
        %1220 = vmatprep.subr.mxu0 0.0
        %1221 = vmatpush1.msra.mxu0 0.0
        %1222 = vmatprep.subr.mxu0 0.0
        %1223 = vmatpush1.msra.mxu0 0.0
        %1224 = vmatprep.subr.mxu0 0.0
        %1225 = vmatpush1.msra.mxu0 0.0
        %1226 = vmatprep.subr.mxu0 0.0
        %1227 = vmatpush1.msra.mxu0 0.0
        %1228 = vmatprep.subr.mxu0 0.0
        %1229 = vmatpush1.msra.mxu0 0.0
        %1230 = vmatprep.subr.mxu0 0.0
        %1231 = vmatpush1.msra.mxu0 0.0
        %1232 = vmatprep.subr.mxu0 0.0
        %1233 = vmatpush1.msra.mxu0 0.0
        %1234 = vmatprep.subr.mxu0 0.0
        %1235 = vmatpush1.msra.mxu0 0.0
        %1236 = vmatprep.subr.mxu0 0.0
        %1237 = vmatpush1.msra.mxu0 0.0
        %1238 = vmatprep.mubr.f32.mxu0 0.0
        %1239 = vmatmul.mubr.f32.gmra.mrb[0].mxu0 %v1172
        %v1240 = vpop.f32.mrb[0].mxu0
        %v1241 = vadd.f32 0.0, %v1240
        %v1242 = vpop.f32.mrb[0].mxu0
        %1243 = vdwg.mxu0
        %v1244 = vrcp.pop %v1167
        %v1245 = vmul.f32 %v1241, %v1244
        %1246 = vrot.lane.b32.xlu0 %v560, 104
        %v1247 = vpop.permute.xlu0 %1246
        %1248 = vrot.lane.b32.xlu0 %v651, 104
        %v1249 = vpop.permute.xlu0 %1248
        %v1250 = vsel %vm754, %v1247, 0
        %v1252 = vsel %vm754, %v1249, 0
        %1254 = vmatprep.subr.mxu0 0.0
        %1255 = vmatpush1.xpose.msra.mxu0 %v1252
        %1256 = vmatprep.subr.mxu0 0.0
        %1257 = vmatpush1.xpose.msra.mxu0 0.0
        %1258 = vmatprep.subr.mxu0 0.0
        %1259 = vmatpush1.xpose.msra.mxu0 0.0
        %1260 = vmatprep.subr.mxu0 0.0
        %1261 = vmatpush1.xpose.msra.mxu0 0.0
        %1262 = vmatprep.subr.mxu0 0.0
        %1263 = vmatpush1.xpose.msra.mxu0 0.0
        %1264 = vmatprep.subr.mxu0 0.0
        %1265 = vmatpush1.xpose.msra.mxu0 0.0
        %1266 = vmatprep.subr.mxu0 0.0
        %1267 = vmatpush1.xpose.msra.mxu0 0.0
        %1268 = vmatprep.subr.mxu0 0.0
        %1269 = vmatpush1.xpose.msra.mxu0 0.0
        %1270 = vmatprep.subr.mxu0 0.0
        %1271 = vmatpush1.xpose.msra.mxu0 0.0
        %1272 = vmatprep.subr.mxu0 0.0
        %1273 = vmatpush1.xpose.msra.mxu0 0.0
        %1274 = vmatprep.subr.mxu0 0.0
        %1275 = vmatpush1.xpose.msra.mxu0 0.0
        %1276 = vmatprep.subr.mxu0 0.0
        %1277 = vmatpush1.xpose.msra.mxu0 0.0
        %1278 = vmatprep.subr.mxu0 0.0
        %1279 = vmatpush1.xpose.msra.mxu0 0.0
        %1280 = vmatprep.subr.mxu0 0.0
        %1281 = vmatpush1.xpose.msra.mxu0 0.0
        %1282 = vmatprep.subr.mxu0 0.0
        %1283 = vmatpush1.xpose.msra.mxu0 0.0
        %1284 = vmatprep.subr.mxu0 0.0
        %1285 = vmatpush1.xpose.msra.mxu0 0.0
        %1286 = vmatprep.subr.mxu0 0.0
        %1287 = vmatpush1.xpose.msra.mxu0 0.0
        %1288 = vmatprep.subr.mxu0 0.0
        %1289 = vmatpush1.xpose.msra.mxu0 0.0
        %1290 = vmatprep.subr.mxu0 0.0
        %1291 = vmatpush1.xpose.msra.mxu0 0.0
        %1292 = vmatprep.subr.mxu0 0.0
        %1293 = vmatpush1.xpose.msra.mxu0 0.0
        %1294 = vmatprep.subr.mxu0 0.0
        %1295 = vmatpush1.xpose.msra.mxu0 0.0
        %1296 = vmatprep.subr.mxu0 0.0
        %1297 = vmatpush1.xpose.msra.mxu0 0.0
        %1298 = vmatprep.subr.mxu0 0.0
        %1299 = vmatpush1.xpose.msra.mxu0 0.0
        %1300 = vmatprep.subr.mxu0 0.0
        %1301 = vmatpush1.xpose.msra.mxu0 0.0
        %1302 = vmatprep.subr.mxu0 0.0
        %1303 = vmatpush1.xpose.msra.mxu0 0.0
        %1304 = vmatprep.subr.mxu0 0.0
        %1305 = vmatpush1.xpose.msra.mxu0 0.0
        %1306 = vmatprep.subr.mxu0 0.0
        %1307 = vmatpush1.xpose.msra.mxu0 0.0
        %1308 = vmatprep.subr.mxu0 0.0
        %1309 = vmatpush1.xpose.msra.mxu0 0.0
        %1310 = vmatprep.subr.mxu0 0.0
        %1311 = vmatpush1.xpose.msra.mxu0 0.0
        %1312 = vmatprep.subr.mxu0 0.0
        %1313 = vmatpush1.xpose.msra.mxu0 0.0
        %1314 = vmatprep.subr.mxu0 0.0
        %1315 = vmatpush1.xpose.msra.mxu0 0.0
        %1316 = vmatprep.subr.mxu0 0.0
        %1317 = vmatpush1.xpose.msra.mxu0 0.0
        %1318 = vmatprep.mubr.f32.mxu0 0.0
        %1319 = vmatmul.mubr.f32.gmra.mrb[0].mxu0 %v1250
        %v1320 = vpop.f32.mrb[0].mxu0
        %v1321 = vadd.f32 %v752, %v1320
        %v1322 = vpop.f32.mrb[0].mxu0
        %1323 = vdwg.mxu0
        %v1324 = vsel %vm754, %v1321, -inf
        %1325 = vmax.xlane.f32.xlu0 %v1324
        %v1326 = vpop.xlane.xlu0 %1325
        %v1327 = vsub.f32 %v1321, %v1326
        %v1328 = vmul.f32 %v1327, 1.442695
        %v1329 = vpow.pop %v1328
        %v1330 = vsel %vm754, %v1329, 0.0
        %1331 = vadd.xlane.f32.xlu0 %v1330
        %v1332 = vpop.xlane.xlu0 %1331
        %1333 = vrot.lane.b32.xlu0 %v744, 104
        %v1334 = vpop.permute.xlu0 %1333
        %v1337 = vsel %vm754, %v1329, 0
        %1339 = vmatprep.subr.mxu0 0.0
        %1340 = vmatpush1.msra.mxu0 %v1334
        %1341 = vmatprep.subr.mxu0 0.0
        %1342 = vmatpush1.msra.mxu0 0.0
        %1343 = vmatprep.subr.mxu0 0.0
        %1344 = vmatpush1.msra.mxu0 0.0
        %1345 = vmatprep.subr.mxu0 0.0
        %1346 = vmatpush1.msra.mxu0 0.0
        %1347 = vmatprep.subr.mxu0 0.0
        %1348 = vmatpush1.msra.mxu0 0.0
        %1349 = vmatprep.subr.mxu0 0.0
        %1350 = vmatpush1.msra.mxu0 0.0
        %1351 = vmatprep.subr.mxu0 0.0
        %1352 = vmatpush1.msra.mxu0 0.0
        %1353 = vmatprep.subr.mxu0 0.0
        %1354 = vmatpush1.msra.mxu0 0.0
        %1355 = vmatprep.subr.mxu0 0.0
        %1356 = vmatpush1.msra.mxu0 0.0
        %1357 = vmatprep.subr.mxu0 0.0
        %1358 = vmatpush1.msra.mxu0 0.0
        %1359 = vmatprep.subr.mxu0 0.0
        %1360 = vmatpush1.msra.mxu0 0.0
        %1361 = vmatprep.subr.mxu0 0.0
        %1362 = vmatpush1.msra.mxu0 0.0
        %1363 = vmatprep.subr.mxu0 0.0
        %1364 = vmatpush1.msra.mxu0 0.0
        %1365 = vmatprep.subr.mxu0 0.0
        %1366 = vmatpush1.msra.mxu0 0.0
        %1367 = vmatprep.subr.mxu0 0.0
        %1368 = vmatpush1.msra.mxu0 0.0
        %1369 = vmatprep.subr.mxu0 0.0
        %1370 = vmatpush1.msra.mxu0 0.0
        %1371 = vmatprep.subr.mxu0 0.0
        %1372 = vmatpush1.msra.mxu0 0.0
        %1373 = vmatprep.subr.mxu0 0.0
        %1374 = vmatpush1.msra.mxu0 0.0
        %1375 = vmatprep.subr.mxu0 0.0
        %1376 = vmatpush1.msra.mxu0 0.0
        %1377 = vmatprep.subr.mxu0 0.0
        %1378 = vmatpush1.msra.mxu0 0.0
        %1379 = vmatprep.subr.mxu0 0.0
        %1380 = vmatpush1.msra.mxu0 0.0
        %1381 = vmatprep.subr.mxu0 0.0
        %1382 = vmatpush1.msra.mxu0 0.0
        %1383 = vmatprep.subr.mxu0 0.0
        %1384 = vmatpush1.msra.mxu0 0.0
        %1385 = vmatprep.subr.mxu0 0.0
        %1386 = vmatpush1.msra.mxu0 0.0
        %1387 = vmatprep.subr.mxu0 0.0
        %1388 = vmatpush1.msra.mxu0 0.0
        %1389 = vmatprep.subr.mxu0 0.0
        %1390 = vmatpush1.msra.mxu0 0.0
        %1391 = vmatprep.subr.mxu0 0.0
        %1392 = vmatpush1.msra.mxu0 0.0
        %1393 = vmatprep.subr.mxu0 0.0
        %1394 = vmatpush1.msra.mxu0 0.0
        %1395 = vmatprep.subr.mxu0 0.0
        %1396 = vmatpush1.msra.mxu0 0.0
        %1397 = vmatprep.subr.mxu0 0.0
        %1398 = vmatpush1.msra.mxu0 0.0
        %1399 = vmatprep.subr.mxu0 0.0
        %1400 = vmatpush1.msra.mxu0 0.0
        %1401 = vmatprep.subr.mxu0 0.0
        %1402 = vmatpush1.msra.mxu0 0.0
        %1403 = vmatprep.mubr.f32.mxu0 0.0
        %1404 = vmatmul.mubr.f32.gmra.mrb[0].mxu0 %v1337
        %v1405 = vpop.f32.mrb[0].mxu0
        %v1406 = vadd.f32 0.0, %v1405
        %v1407 = vpop.f32.mrb[0].mxu0
        %1408 = vdwg.mxu0
        %v1409 = vrcp.pop %v1332
        %v1410 = vmul.f32 %v1406, %v1409
        %1412 = vrot.lane.b32.xlu0 %v1080, 8
        %v1413 = vpop.permute.xlu0 %1412
        %1416 = vrot.lane.b32.xlu0 %v1245, 16
        %v1417 = vpop.permute.xlu0 %1416
        %1420 = vrot.lane.b32.xlu0 %v1410, 24
        %v1421 = vpop.permute.xlu0 %1420
        %v1423 = vsel %vm754, %v914, %v1413
        %vm1424 = vcmask 130048
        %v1425 = vsel %vm1424, %v1423, %v1417
        %vm1426 = vcmask 195584
        %v1427 = vsel %vm1426, %v1425, %v1421
        %1428 = vst.msk [vmem:[%s446] sm:$0xff] %vm474, %v1427
        %s1429 = sand.u32 %s257, 1
        %s1430 = scalar_lea.sflag [#allocation4], %s1429
        %s1431 = sand.u32 %s257, 1
        %s1432 = smul.addr %s1431, 8
        %s1433 = scalar_lea.vmem [#allocation10], %s1432
        // Predicated region
        $region69: #{tpu_custom_call.1} parent=51 // pred_check
          %p1434 = pneg %p267
        $region70: #{tpu_custom_call.1} parent=51 // pred_check_branch
          %1436 = sbr.rel (%p1434) target = $region72
        $region71: #{tpu_custom_call.1} parent=51 // pred_region
          %s1438 = ssub.s32 128, 128
          %1439 = vsyncadd %s1430, %s1438
          %s1440 = sadd.s32 %s32, %s31
          %s1441 = smul.addr %s1440, 128
          %s1442 = scalar_lea.hbm %s8, %s1441
          %s1444 = sshll.u32 %s1433, 4
          %s1445 = int_to_ptr.vmem [resolvable:$true] %s1444
          %1447 = dma.vmem_to_hbm [thread:$0]  %s1445, 128, %s1442, %s1430
        $region72: #{tpu_custom_call.1} parent=51 // pred_fallthru
          _
      $region52: #{tpu_custom_call.1} parent=5 // pred_fallthru
        _
      %p1448 = scmp.le.s32.totalorder 2, %s22
      // Predicated region
      $region73: #{tpu_custom_call.1} parent=5 // pred_check
        %p1449 = pneg %p1448
      $region74: #{tpu_custom_call.1} parent=5 // pred_check_branch
        %1451 = sbr.rel (%p1449) target = $region76
      $region75: #{tpu_custom_call.1} parent=5 // pred_region
        %s1452 = ssub.s32 %s22, 2
        // Predicated region
        $region77: #{tpu_custom_call.1} parent=75 // pred_check
          %p1453 = pneg %p273
        $region78: #{tpu_custom_call.1} parent=75 // pred_check_branch
          %1455 = sbr.rel (%p1453) target = $region80
        $region79: #{tpu_custom_call.1} parent=75 // pred_region
          %s1456 = sand.u32 %s258, 1
          %s1457 = scalar_lea.sflag [#allocation4], %s1456
          %s1458 = sand.u32 %s258, 1
          %s1459 = smul.addr %s1458, 8
          %s1460 = scalar_lea.vmem [#allocation10], %s1459
          %1461 = dma.done %s1457, 128
        $region80: #{tpu_custom_call.1} parent=75 // pred_fallthru
          _
      $region76: #{tpu_custom_call.1} parent=5 // pred_fallthru
        _
    $region6: #{tpu_custom_call.1} parent=1 // loop_footer
      %s26 = sadd.s32 1, %s22
    $region7: #{tpu_custom_call.1} parent=1 // loop_footer_branch
      %21 = sbr.rel target = $region3
    $region8: #{tpu_custom_call.1} parent=1 // loop_exit
      _
    %1462 = vsyncpa [#allocation3], 1
    %s1463 = scalar_lea.sflag [#allocation3], 1
    %1464 = vsyncpa %s1463, 1
    %1465 = vsyncpa [#allocation6], 1
    %1466 = vsyncpa [#allocation9], 1
    %1467 = vsyncpa [#allocation4], 1
    %s1468 = scalar_lea.sflag [#allocation4], 1
    %1469 = vsyncpa %s1468, 1

</llo_original>
